<compile_context>
chip_gen: v7x
topology: tpu7x:2x2x1
jax: 0.10.0
libtpu: 0.0.40
codegen_flags: <defaults>
</compile_context>

<pallas_src>
import functools

import jax
import jax.numpy as jnp
from jax.experimental import pallas as pl
from jax.experimental.pallas import tpu as pltpu

LANE = 128           # TPU lane width
K1, S1 = 10, 5       # conv layer 1: kernel 10, stride 5
K2, S2 = 8, 4        # conv layer 2: kernel 8, stride 4   (K2 % S2 == 0)
KPAD = 16            # conv-1 taps packed to 16 lanes per phase
TB_TARGET = 256      # conv-2 output frames per grid block (multiple of 8)


def _round_up(x, m):
    return (x + m - 1) // m * m


def _vmem_limit_bytes(TB, TBg, hidden, embed):
    """Resident-VMEM estimate: double-buffered grid blocks + weights + in-kernel
    intermediates (lane dims padded to the 128-lane vreg width)."""
    F32, BF16 = 4, 2
    lanes = lambda n: _round_up(n, LANE)
    wide = S2 * hidden
    blocks = TBg * lanes(S2 * KPAD) * F32 + TB * lanes(embed) * F32       # p blk, out blk
    weights = (S2 * KPAD * lanes(wide) * BF16 + lanes(wide) * F32          # w1_eff, b1_eff
               + wide * lanes(2 * hidden) * BF16 + 3 * lanes(hidden) * F32  # w2c, b2, ln
               + hidden * lanes(embed) * BF16 + lanes(embed) * F32)        # wp, bp
    interm = (TBg * lanes(wide) * (F32 + BF16)       # h1 (f32 + bf16 cast)
              + TBg * lanes(2 * hidden) * F32        # conv-2 partials
              + 4 * TB * lanes(hidden) * F32)        # acc / h2a / h2n / cast
    total = 2 * blocks + weights + interm            # grid blocks are double-buffered
    return int(min(64 * 2 ** 20, max(4 * 2 ** 20, 2 * total)))


# ---------------------------------------------------------------------------
# Fused kernel per frame block:
#   conv1(+folded full-tensor LN) + GELU  ->  conv2 + GELU  ->  LN + projection
# ---------------------------------------------------------------------------
def _fused_kernel(TB, hidden,
                  p_ref, w1_ref, b1_ref, w2_ref, b2_ref, g_ref, be_ref,
                  wp_ref, bp_ref, o_ref):
    # ---- conv layer 1 (full-waveform layer norm folded into w1/b1) ----
    # p: (TBg, S2*16) raw waveform patches, lanes [j*16, j*16+10) = taps of phase j.
    # w1 is block-diagonal (S2*16, S2*hidden), so this single bf16 dot writes the
    # phase-stacked slab h1 where lanes [j*hidden,(j+1)*hidden) hold conv-1 frame
    # 4*g + j of the current block.
    p = p_ref[0].astype(jnp.bfloat16)                               # (TBg, 64)
    h1 = jnp.dot(p, w1_ref[...], preferred_element_type=jnp.float32) + b1_ref[...]
    h1 = jax.nn.gelu(h1, approximate=True)   # TODO(synk): fairseq uses exact erf GELU

    # ---- conv layer 2: all K2=8 taps in ONE K=512 / N=256 bf16 dot ----
    # Output lanes [0, hidden)        : taps 0..3  (conv-1 group g = f)
    # Output lanes [hidden, 2*hidden) : taps 4..7  (conv-1 group g = f + 1)
    h2 = jnp.dot(h1.astype(jnp.bfloat16), w2_ref[...],
                 preferred_element_type=jnp.float32)                 # (TBg, 2*hidden)
    # Single +1-row offset combine (one small (TB,128) sublane relayout, down from
    # four misaligned (64,128) copies in the previous version; hidden under MXU work).
    acc = h2[:TB, :hidden] + h2[1:TB + 1, hidden:]
    h2a = jax.nn.gelu(acc + b2_ref[...], approximate=True)           # (TB, hidden) f32

    # ---- per-frame LayerNorm (affine) + linear projection, fused ----
    mu = jnp.mean(h2a, axis=-1, keepdims=True)
    var = jnp.mean(jnp.square(h2a - mu), axis=-1, keepdims=True)
    h2n = (h2a - mu) * jax.lax.rsqrt(var + 1e-5) * g_ref[...] + be_ref[...]
    o_ref[...] = (jnp.dot(h2n.astype(jnp.bfloat16), wp_ref[...],
                          preferred_element_type=jnp.float32) + bp_ref[...])


# ---------------------------------------------------------------------------
# Wrapper mirroring SpeechLMWrapper.forward
# ---------------------------------------------------------------------------
class SpeechLMWrapperPallas:
    NORMALIZE = True  # stands in for checkpoint['cfg']['task']['normalize']

    def __init__(self, key, hidden=128, embed=128):
        assert hidden == LANE, "hidden must be lane-dense (128) for this kernel"
        assert embed % LANE == 0, "embed must be a multiple of the 128-lane width"
        k1, k2, k3 = jax.random.split(key, 3)
        self.hidden, self.embed = hidden, embed

        # f32 master weights (synthetic, deterministic)
        self.w1 = 0.05 * jax.random.normal(k1, (K1, hidden), jnp.float32)
        self.b1 = jnp.zeros((hidden,), jnp.float32)
        self.w2 = 0.05 * jax.random.normal(k2, (K2, hidden, hidden), jnp.float32)
        self.b2 = jnp.zeros((1, hidden), jnp.float32)
        self.ln_gamma = jnp.ones((1, hidden), jnp.float32)
        self.ln_beta = jnp.zeros((1, hidden), jnp.float32)
        self.wp = 0.05 * jax.random.normal(k3, (hidden, embed), jnp.float32)
        self.bp = jnp.zeros((1, embed), jnp.float32)

        # conv-1 weight as a block-diagonal (S2*16, S2*hidden) slab: phase j's 10 real
        # taps occupy rows [j*16, j*16+10) and columns [j*hidden, (j+1)*hidden); the
        # zero rows/columns make the single conv-1 dot produce the phase-stacked h1.
        w1_wide = jnp.zeros((S2 * KPAD, S2 * hidden), jnp.float32)
        for j in range(S2):
            w1_wide = w1_wide.at[j * KPAD:j * KPAD + K1,
                                 j * hidden:(j + 1) * hidden].set(self.w1)
        self._w1_wide_f32 = w1_wide      # scaled by 1/std per call, then cast to bf16

        # conv-2 weights: taps k = S2*a + j stacked so one (S2*hidden, 2*hidden) bf16
        # dot computes both tap groups; columns [0,hidden)=a=0 taps, [hidden,2h)=a=1.
        w2a0 = jnp.concatenate([self.w2[j] for j in range(S2)], axis=0)
        w2a1 = jnp.concatenate([self.w2[S2 + j] for j in range(S2)], axis=0)
        self._w2c_bf16 = jnp.concatenate([w2a0, w2a1], axis=1).astype(jnp.bfloat16)
        self._wp_bf16 = self.wp.astype(jnp.bfloat16)

    def __call__(self, wav_input_16khz):
        # wav_input_16khz: (B=1, T) float32
        x = wav_input_16khz[0]
        T = int(x.shape[0])
        hidden, embed = self.hidden, self.embed

        # --- full-tensor layer norm stats (one XLA reduction), folded into conv-1:
        #     (x - mean) * inv_std @ W  ==  x @ (inv_std * W) + (b - mean*inv_std*1'W)
        if self.NORMALIZE:
            mean = jnp.mean(x)
            var = jnp.mean(jnp.square(x - mean))
            inv_std = jax.lax.rsqrt(var + 1e-5)
        else:
            mean = jnp.float32(0.0)
            inv_std = jnp.float32(1.0)
        w1_eff = (self._w1_wide_f32 * inv_std).astype(jnp.bfloat16)
        b1_vec = self.b1 - mean * inv_std * jnp.sum(self.w1, axis=0)        # (hidden,)
        b1_eff = jnp.tile(b1_vec[None, :], (1, S2))                         # (1, S2*h)

        # --- frame geometry & frame-tiled grid ---
        F1 = (T - K1) // S1 + 1                     # conv-1 output frames
        F2 = (F1 - K2) // S2 + 1                    # conv-2 output frames (= embs_len)
        TB = min(TB_TARGET, _round_up(F2, 8))       # conv-2 frames per grid block
        NB = (F2 + TB - 1) // TB                    # number of grid blocks
        TBg = TB + 8                                # conv-1 frames / phase / block (+halo)

        # --- host im2col, phase-split, block-split, 16-lane packed per phase ---
        # p_wide[b, g, j*16 + k] = wav[5*(4*(b*TB+g)+j) + k], zero for invalid frames.
        bb = jnp.arange(NB)[:, None, None, None]
        gg = jnp.arange(TBg)[None, :, None, None]
        jj = jnp.arange(S2)[None, None, :, None]
        kk = jnp.arange(K1)[None, None, None, :]
        frame = S2 * (bb * TB + gg) + jj                                   # (NB,TBg,S2,1)
        valid = frame < F1
        samp = jnp.clip(frame * S1 + kk, 0, T - 1)                         # (NB,TBg,S2,K1)
        patches = jnp.where(valid, x[samp], 0.0)
        p_wide = jnp.zeros((NB, TBg, S2, KPAD), jnp.float32).at[..., :K1].set(patches)
        p_wide = p_wide.reshape(NB, TBg, S2 * KPAD)

        kernel = functools.partial(_fused_kernel, TB, hidden)
        rep = lambda b: (0, 0)                      # weights: resident, fetched once
        out = pl.pallas_call(
            kernel,
            out_shape=jax.ShapeDtypeStruct((NB * TB, embed), jnp.float32),
            grid=(NB,),
            in_specs=[
                pl.BlockSpec((1, TBg, S2 * KPAD), lambda b: (b, 0, 0)),    # patches
                pl.BlockSpec((S2 * KPAD, S2 * hidden), rep),               # w1_eff (bf16)
                pl.BlockSpec((1, S2 * hidden), rep),                       # b1_eff
                pl.BlockSpec((S2 * hidden, 2 * hidden), rep),              # w2 combined
                pl.BlockSpec((1, hidden), rep),                            # b2
                pl.BlockSpec((1, hidden), rep),                            # ln gamma
                pl.BlockSpec((1, hidden), rep),                            # ln beta
                pl.BlockSpec((hidden, embed), rep),                        # wp (bf16)
                pl.BlockSpec((1, embed), rep),                             # bp
            ],
            out_specs=pl.BlockSpec((TB, embed), lambda b: (b, 0)),
            compiler_params=pltpu.CompilerParams(
                dimension_semantics=("parallel",),
                vmem_limit_bytes=_vmem_limit_bytes(TB, TBg, hidden, embed)),
        )(p_wide, w1_eff, b1_eff, self._w2c_bf16, self.b2,
          self.ln_gamma, self.ln_beta, self._wp_bf16, self.bp)

        embs = out[:F2][None]                                              # (1, F2, embed)
        batch_size, embs_len = embs.shape[0], embs.shape[1]
        cond_mask = jnp.ones((batch_size, embs_len), jnp.float32)
        return embs, cond_mask                      # detached by construction


# ---------------------------------------------------------------------------
# Pure-JAX f32 reference (for the in-script correctness check)
# ---------------------------------------------------------------------------
def _reference_forward(model, wav_input_16khz):
    hi = jax.lax.Precision.HIGHEST
    x = wav_input_16khz[0]
    if model.NORMALIZE:
        m = jnp.mean(x)
        v = jnp.mean((x - m) ** 2)
        x = (x - m) * jax.lax.rsqrt(v + 1e-5)
    T = x.shape[0]
    F1 = (T - K1) // S1 + 1
    idx1 = jnp.arange(F1)[:, None] * S1 + jnp.arange(K1)[None, :]
    h1 = jax.nn.gelu(jnp.dot(x[idx1], model.w1, precision=hi) + model.b1,
                     approximate=True)
    F2 = (F1 - K2) // S2 + 1
    idx2 = jnp.arange(F2)[:, None] * S2 + jnp.arange(K2)[None, :]
    h2 = jnp.einsum("fkh,khd->fd", h1[idx2], model.w2, precision=hi) + model.b2
    h2 = jax.nn.gelu(h2, approximate=True)
    mu = jnp.mean(h2, axis=-1, keepdims=True)
    var = jnp.mean((h2 - mu) ** 2, axis=-1, keepdims=True)
    h2n = (h2 - mu) * jax.lax.rsqrt(var + 1e-5) * model.ln_gamma + model.ln_beta
    return (jnp.dot(h2n, model.wp, precision=hi) + model.bp)[None]


if __name__ == "__main__":
    key = jax.random.PRNGKey(0)
    k_wav, k_params = jax.random.split(key)

    T = 1280  # small 16 kHz waveform snippet
    wav = jax.random.normal(k_wav, (1, T), jnp.float32)

    model = SpeechLMWrapperPallas(k_params, hidden=128, embed=128)
    embs, cond_mask = model(wav)
    jax.block_until_ready((embs, cond_mask))

    # F1 = (1280-10)//5+1 = 255 ; F2 = (255-8)//4+1 = 62
    assert embs.shape == (1, 62, 128), embs.shape
    assert cond_mask.shape == (1, 62), cond_mask.shape
    assert bool(jnp.all(cond_mask == 1.0))
    assert bool(jnp.all(jnp.isfinite(embs)))

    ref = _reference_forward(model, wav)
    max_err = float(jnp.max(jnp.abs(embs - ref)))
    assert max_err < 5e-2, f"mismatch vs pure-JAX reference: {max_err}"

    print("KERNEL_OK")
</pallas_src>

<mosaic_0001>
module attributes {stable_mosaic.version = 11 : i64} {
  func.func @_fused_kernel(%arg0: i32, %arg1: memref<1x72x64xf32, #tpu.memory_space<vmem>>, %arg2: memref<64x512xbf16, #tpu.memory_space<vmem>>, %arg3: memref<1x512xf32, #tpu.memory_space<vmem>>, %arg4: memref<512x256xbf16, #tpu.memory_space<vmem>>, %arg5: memref<1x128xf32, #tpu.memory_space<vmem>>, %arg6: memref<1x128xf32, #tpu.memory_space<vmem>>, %arg7: memref<1x128xf32, #tpu.memory_space<vmem>>, %arg8: memref<128x128xbf16, #tpu.memory_space<vmem>>, %arg9: memref<1x128xf32, #tpu.memory_space<vmem>>, %arg10: memref<64x128xf32, #tpu.memory_space<vmem>>) attributes {dimension_semantics = [#tpu.dimension_semantics<parallel>], iteration_bounds = array<i64: 1>, scalar_prefetch = 0 : i64, scratch_operands = 0 : i64, tpu.core_type = #tpu.core_type<tc>, window_params = [{transform_indices = @transform_0, window_bounds = array<i64: 1, 72, 64>}, {pipeline_mode = #tpu.pipeline_mode<synchronous>, transform_indices = @transform_1, window_bounds = array<i64: 64, 512>}, {pipeline_mode = #tpu.pipeline_mode<synchronous>, transform_indices = @transform_2, window_bounds = array<i64: 1, 512>}, {pipeline_mode = #tpu.pipeline_mode<synchronous>, transform_indices = @transform_3, window_bounds = array<i64: 512, 256>}, {pipeline_mode = #tpu.pipeline_mode<synchronous>, transform_indices = @transform_4, window_bounds = array<i64: 1, 128>}, {pipeline_mode = #tpu.pipeline_mode<synchronous>, transform_indices = @transform_5, window_bounds = array<i64: 1, 128>}, {pipeline_mode = #tpu.pipeline_mode<synchronous>, transform_indices = @transform_6, window_bounds = array<i64: 1, 128>}, {pipeline_mode = #tpu.pipeline_mode<synchronous>, transform_indices = @transform_7, window_bounds = array<i64: 128, 128>}, {pipeline_mode = #tpu.pipeline_mode<synchronous>, transform_indices = @transform_8, window_bounds = array<i64: 1, 128>}, {transform_indices = @transform_9, window_bounds = array<i64: 64, 128>}]} {
    %c0 = arith.constant 0 : index
    %c0_0 = arith.constant 0 : index
    %c0_1 = arith.constant 0 : index
    %0 = vector.load %arg1[%c0, %c0_0, %c0_1] : memref<1x72x64xf32, #tpu.memory_space<vmem>>, vector<1x72x64xf32>
    %1 = vector.shape_cast %0 : vector<1x72x64xf32> to vector<72x64xf32>
    %2 = arith.truncf %1 : vector<72x64xf32> to vector<72x64xbf16>
    %c0_2 = arith.constant 0 : index
    %c0_3 = arith.constant 0 : index
    %3 = vector.load %arg2[%c0_2, %c0_3] : memref<64x512xbf16, #tpu.memory_space<vmem>>, vector<64x512xbf16>
    %cst = arith.constant dense<0.000000e+00> : vector<72x512xf32>
    %4 = tpu.matmul %2, %3, %cst {dimension_numbers = #tpu.dot_dimension_numbers<[1], [0], [0], [1], [0, 0, 1, 1], [], []>} : vector<72x64xbf16>, vector<64x512xbf16>, vector<72x512xf32> -> vector<72x512xf32>
    %c0_4 = arith.constant 0 : index
    %c0_5 = arith.constant 0 : index
    %5 = vector.load %arg3[%c0_4, %c0_5] : memref<1x512xf32, #tpu.memory_space<vmem>>, vector<1x512xf32>
    %6 = vector.broadcast %5 : vector<1x512xf32> to vector<72x512xf32>
    %7 = arith.addf %4, %6 : vector<72x512xf32>
    %8 = arith.mulf %7, %7 : vector<72x512xf32>
    %9 = arith.mulf %7, %8 : vector<72x512xf32>
    %cst_6 = arith.constant 4.471500e-02 : f32
    %10 = vector.broadcast %cst_6 : f32 to vector<72x512xf32>
    %11 = arith.mulf %10, %9 : vector<72x512xf32>
    %12 = arith.addf %7, %11 : vector<72x512xf32>
    %cst_7 = arith.constant 0.797884583 : f32
    %13 = vector.broadcast %cst_7 : f32 to vector<72x512xf32>
    %14 = arith.mulf %13, %12 : vector<72x512xf32>
    %15 = math.tanh %14 : vector<72x512xf32>
    %cst_8 = arith.constant 1.000000e+00 : f32
    %16 = vector.broadcast %cst_8 : f32 to vector<72x512xf32>
    %17 = arith.addf %16, %15 : vector<72x512xf32>
    %cst_9 = arith.constant 5.000000e-01 : f32
    %18 = vector.broadcast %cst_9 : f32 to vector<72x512xf32>
    %19 = arith.mulf %18, %17 : vector<72x512xf32>
    %20 = arith.mulf %7, %19 : vector<72x512xf32>
    %21 = arith.truncf %20 : vector<72x512xf32> to vector<72x512xbf16>
    %c0_10 = arith.constant 0 : index
    %c0_11 = arith.constant 0 : index
    %22 = vector.load %arg4[%c0_10, %c0_11] : memref<512x256xbf16, #tpu.memory_space<vmem>>, vector<512x256xbf16>
    %cst_12 = arith.constant dense<0.000000e+00> : vector<72x256xf32>
    %23 = tpu.matmul %21, %22, %cst_12 {dimension_numbers = #tpu.dot_dimension_numbers<[1], [0], [0], [1], [0, 0, 1, 1], [], []>} : vector<72x512xbf16>, vector<512x256xbf16>, vector<72x256xf32> -> vector<72x256xf32>
    %24 = vector.extract_strided_slice %23 {offsets = [0, 0], sizes = [64, 128], strides = [1, 1]} : vector<72x256xf32> to vector<64x128xf32>
    %25 = vector.extract_strided_slice %23 {offsets = [1, 128], sizes = [64, 128], strides = [1, 1]} : vector<72x256xf32> to vector<64x128xf32>
    %26 = arith.addf %24, %25 : vector<64x128xf32>
    %c0_13 = arith.constant 0 : index
    %c0_14 = arith.constant 0 : index
    %27 = vector.load %arg5[%c0_13, %c0_14] : memref<1x128xf32, #tpu.memory_space<vmem>>, vector<1x128xf32>
    %28 = vector.broadcast %27 : vector<1x128xf32> to vector<64x128xf32>
    %29 = arith.addf %26, %28 : vector<64x128xf32>
    %30 = arith.mulf %29, %29 : vector<64x128xf32>
    %31 = arith.mulf %29, %30 : vector<64x128xf32>
    %cst_15 = arith.constant 4.471500e-02 : f32
    %32 = vector.broadcast %cst_15 : f32 to vector<64x128xf32>
    %33 = arith.mulf %32, %31 : vector<64x128xf32>
    %34 = arith.addf %29, %33 : vector<64x128xf32>
    %cst_16 = arith.constant 0.797884583 : f32
    %35 = vector.broadcast %cst_16 : f32 to vector<64x128xf32>
    %36 = arith.mulf %35, %34 : vector<64x128xf32>
    %37 = math.tanh %36 : vector<64x128xf32>
    %cst_17 = arith.constant 1.000000e+00 : f32
    %38 = vector.broadcast %cst_17 : f32 to vector<64x128xf32>
    %39 = arith.addf %38, %37 : vector<64x128xf32>
    %cst_18 = arith.constant 5.000000e-01 : f32
    %40 = vector.broadcast %cst_18 : f32 to vector<64x128xf32>
    %41 = arith.mulf %40, %39 : vector<64x128xf32>
    %42 = arith.mulf %29, %41 : vector<64x128xf32>
    %cst_19 = arith.constant dense<0.000000e+00> : vector<64xf32>
    %43 = vector.multi_reduction <add>, %42, %cst_19 [1] : vector<64x128xf32> to vector<64xf32>
    %44 = vector.shape_cast %43 : vector<64xf32> to vector<64x1xf32>
    %cst_20 = arith.constant 1.280000e+02 : f32
    %45 = vector.broadcast %cst_20 : f32 to vector<64x1xf32>
    %46 = arith.divf %44, %45 : vector<64x1xf32>
    %47 = vector.broadcast %46 : vector<64x1xf32> to vector<64x128xf32>
    %48 = arith.subf %42, %47 : vector<64x128xf32>
    %49 = arith.mulf %48, %48 : vector<64x128xf32>
    %cst_21 = arith.constant dense<0.000000e+00> : vector<64xf32>
    %50 = vector.multi_reduction <add>, %49, %cst_21 [1] : vector<64x128xf32> to vector<64xf32>
    %51 = vector.shape_cast %50 : vector<64xf32> to vector<64x1xf32>
    %cst_22 = arith.constant 1.280000e+02 : f32
    %52 = vector.broadcast %cst_22 : f32 to vector<64x1xf32>
    %53 = arith.divf %51, %52 : vector<64x1xf32>
    %54 = vector.broadcast %46 : vector<64x1xf32> to vector<64x128xf32>
    %55 = arith.subf %42, %54 : vector<64x128xf32>
    %cst_23 = arith.constant 9.99999974E-6 : f32
    %56 = vector.broadcast %cst_23 : f32 to vector<64x1xf32>
    %57 = arith.addf %53, %56 : vector<64x1xf32>
    %58 = math.rsqrt %57 : vector<64x1xf32>
    %59 = vector.broadcast %58 : vector<64x1xf32> to vector<64x128xf32>
    %60 = arith.mulf %55, %59 : vector<64x128xf32>
    %c0_24 = arith.constant 0 : index
    %c0_25 = arith.constant 0 : index
    %61 = vector.load %arg6[%c0_24, %c0_25] : memref<1x128xf32, #tpu.memory_space<vmem>>, vector<1x128xf32>
    %62 = vector.broadcast %61 : vector<1x128xf32> to vector<64x128xf32>
    %63 = arith.mulf %60, %62 : vector<64x128xf32>
    %c0_26 = arith.constant 0 : index
    %c0_27 = arith.constant 0 : index
    %64 = vector.load %arg7[%c0_26, %c0_27] : memref<1x128xf32, #tpu.memory_space<vmem>>, vector<1x128xf32>
    %65 = vector.broadcast %64 : vector<1x128xf32> to vector<64x128xf32>
    %66 = arith.addf %63, %65 : vector<64x128xf32>
    %67 = arith.truncf %66 : vector<64x128xf32> to vector<64x128xbf16>
    %c0_28 = arith.constant 0 : index
    %c0_29 = arith.constant 0 : index
    %68 = vector.load %arg8[%c0_28, %c0_29] : memref<128x128xbf16, #tpu.memory_space<vmem>>, vector<128x128xbf16>
    %cst_30 = arith.constant dense<0.000000e+00> : vector<64x128xf32>
    %69 = tpu.matmul %67, %68, %cst_30 {dimension_numbers = #tpu.dot_dimension_numbers<[1], [0], [0], [1], [0, 0, 1, 1], [], []>} : vector<64x128xbf16>, vector<128x128xbf16>, vector<64x128xf32> -> vector<64x128xf32>
    %c0_31 = arith.constant 0 : index
    %c0_32 = arith.constant 0 : index
    %70 = vector.load %arg9[%c0_31, %c0_32] : memref<1x128xf32, #tpu.memory_space<vmem>>, vector<1x128xf32>
    %71 = vector.broadcast %70 : vector<1x128xf32> to vector<64x128xf32>
    %72 = arith.addf %69, %71 : vector<64x128xf32>
    %c0_33 = arith.constant 0 : index
    %c0_34 = arith.constant 0 : index
    %73 = vector.load %arg10[%c0_33, %c0_34] : memref<64x128xf32, #tpu.memory_space<vmem>>, vector<64x128xf32>
    tpu.vector_store %arg10[%c0_33, %c0_34], %72 {strides = array<i32>} : memref<64x128xf32, #tpu.memory_space<vmem>>, vector<64x128xf32>,
    return
  }
  func.func @transform_0(%arg0: i32) -> (i32, i32, i32) {
    %c0_i32 = arith.constant 0 : i32
    %c0_i32_0 = arith.constant 0 : i32
    %c0_i32_1 = arith.constant 0 : i32
    return %arg0, %c0_i32, %c0_i32_0 : i32, i32, i32
  }
  func.func @transform_1(%arg0: i32) -> (i32, i32) {
    %c0_i32 = arith.constant 0 : i32
    %c0_i32_0 = arith.constant 0 : i32
    %c0_i32_1 = arith.constant 0 : i32
    return %c0_i32, %c0_i32_0 : i32, i32
  }
  func.func @transform_2(%arg0: i32) -> (i32, i32) {
    %c0_i32 = arith.constant 0 : i32
    %c0_i32_0 = arith.constant 0 : i32
    %c0_i32_1 = arith.constant 0 : i32
    return %c0_i32, %c0_i32_0 : i32, i32
  }
  func.func @transform_3(%arg0: i32) -> (i32, i32) {
    %c0_i32 = arith.constant 0 : i32
    %c0_i32_0 = arith.constant 0 : i32
    %c0_i32_1 = arith.constant 0 : i32
    return %c0_i32, %c0_i32_0 : i32, i32
  }
  func.func @transform_4(%arg0: i32) -> (i32, i32) {
    %c0_i32 = arith.constant 0 : i32
    %c0_i32_0 = arith.constant 0 : i32
    %c0_i32_1 = arith.constant 0 : i32
    return %c0_i32, %c0_i32_0 : i32, i32
  }
  func.func @transform_5(%arg0: i32) -> (i32, i32) {
    %c0_i32 = arith.constant 0 : i32
    %c0_i32_0 = arith.constant 0 : i32
    %c0_i32_1 = arith.constant 0 : i32
    return %c0_i32, %c0_i32_0 : i32, i32
  }
  func.func @transform_6(%arg0: i32) -> (i32, i32) {
    %c0_i32 = arith.constant 0 : i32
    %c0_i32_0 = arith.constant 0 : i32
    %c0_i32_1 = arith.constant 0 : i32
    return %c0_i32, %c0_i32_0 : i32, i32
  }
  func.func @transform_7(%arg0: i32) -> (i32, i32) {
    %c0_i32 = arith.constant 0 : i32
    %c0_i32_0 = arith.constant 0 : i32
    %c0_i32_1 = arith.constant 0 : i32
    return %c0_i32, %c0_i32_0 : i32, i32
  }
  func.func @transform_8(%arg0: i32) -> (i32, i32) {
    %c0_i32 = arith.constant 0 : i32
    %c0_i32_0 = arith.constant 0 : i32
    %c0_i32_1 = arith.constant 0 : i32
    return %c0_i32, %c0_i32_0 : i32, i32
  }
  func.func @transform_9(%arg0: i32) -> (i32, i32) {
    %c0_i32 = arith.constant 0 : i32
    %c0_i32_0 = arith.constant 0 : i32
    return %arg0, %c0_i32 : i32, i32
  }
}

</mosaic_0001>

<llo_original>
// kernel: tpu_custom_call.1
$region0: #{tpu_custom_call.1}
  #allocation0 [shape = 'u32[]', space=smem, size = 0x4, offset = 0x4, fixed_abs, tag = 'smem constant byte address 0x4 - core index']
  #allocation1 [shape = 'u32[144,128]{1,0:T(1,128)}', space=vmem, size = 0x12000, scoped, tag = 'internal scratch']
  %s0 = inlined_call_operand.vmem [shape: f32[1,72,64], index: 0, kind: input, shape index: {}]
  %s1 = inlined_call_operand.vmem [shape: bf16[64,512], index: 1, kind: input, shape index: {}]
  %s2 = inlined_call_operand.vmem [shape: f32[1,512], index: 2, kind: input, shape index: {}]
  %s3 = inlined_call_operand.hbm [shape: bf16[512,256], index: 3, kind: input, shape index: {}]
  %s4 = inlined_call_operand.vmem [shape: f32[1,128], index: 4, kind: input, shape index: {}]
  %s5 = inlined_call_operand.vmem [shape: f32[1,128], index: 5, kind: input, shape index: {}]
  %s6 = inlined_call_operand.vmem [shape: f32[1,128], index: 6, kind: input, shape index: {}]
  %s7 = inlined_call_operand.hbm [shape: bf16[128,128], index: 7, kind: input, shape index: {}]
  %s8 = inlined_call_operand.vmem [shape: f32[1,128], index: 8, kind: input, shape index: {}]
  %s9 = inlined_call_operand.hbm [shape: f32[64,128], index: 9, kind: output, shape index: {}]
  %s10 = sld [smem:[#allocation0]]
  $region54: #{tpu_custom_call.1} parent=0
    _
  %s12 = ssub.s32 1, %s10
  %s13 = scalar_select 0, %s12, %s10
  $region1: #{tpu_custom_call.1} parent=0
    #allocation2 [shape = 'u8[262144]{0}', space=vmem, size = 0x40000, scoped, tag = 'input window, operand 3, single buffered']
    #allocation3 [shape = 's32[1]{0}', space=sflag, size = 0x4, scoped, tag = 'scoped memory for tpu_custom_call.1']
    #allocation4 [shape = 's32[1]{0}', space=sflag, size = 0x4, scoped, tag = 'scoped memory for tpu_custom_call.1']
    #allocation5 [shape = 'u8[32768]{0}', space=vmem, size = 0x8000, scoped, tag = 'input window, operand 7, single buffered']
    #allocation6 [shape = 's32[1]{0}', space=sflag, size = 0x4, scoped, tag = 'scoped memory for tpu_custom_call.1']
    #allocation7 [shape = 'u8[32768]{0}', space=vmem, size = 0x8000, scoped, tag = 'output window, operand 0, single buffered']
    %14 = vsyncpa [#allocation3], 0
    %15 = vsyncpa [#allocation6], 0
    %16 = vsyncpa [#allocation4], 0
    // Predicated region
    $region2: #{tpu_custom_call.1} parent=1 // pred_check
      _
    $region3: #{tpu_custom_call.1} parent=1 // pred_check_branch
      %18 = sbr.rel (0) target = $region5
    $region4: #{tpu_custom_call.1} parent=1 // pred_region
      _
    $region5: #{tpu_custom_call.1} parent=1 // pred_fallthru
      _
    // Predicated region
    $region6: #{tpu_custom_call.1} parent=1 // pred_check
      _
    $region7: #{tpu_custom_call.1} parent=1 // pred_check_branch
      %20 = sbr.rel (0) target = $region9
    $region8: #{tpu_custom_call.1} parent=1 // pred_region
      _
    $region9: #{tpu_custom_call.1} parent=1 // pred_fallthru
      _
    // Predicated region
    $region10: #{tpu_custom_call.1} parent=1 // pred_check
      _
    $region11: #{tpu_custom_call.1} parent=1 // pred_check_branch
      %22 = sbr.rel (0) target = $region13
    $region12: #{tpu_custom_call.1} parent=1 // pred_region
      _
    $region13: #{tpu_custom_call.1} parent=1 // pred_fallthru
      _
    // Predicated region
    $region14: #{tpu_custom_call.1} parent=1 // pred_check
      _
    $region15: #{tpu_custom_call.1} parent=1 // pred_check_branch
      %24 = sbr.rel (0) target = $region17
    $region16: #{tpu_custom_call.1} parent=1 // pred_region
      %s26 = ssub.s32 8192, 8192
      %27 = vsyncadd [#allocation3], %s26
      %s28 = sshll.u32 [#allocation2], 4
      %s29 = int_to_ptr.vmem [resolvable:$true] %s28
      %34 = dma.hbm_to_vmem [thread:$0]  %s3, 8192, %s29, [#allocation3], 128, 128, 8
    $region17: #{tpu_custom_call.1} parent=1 // pred_fallthru
      _
    // Predicated region
    $region18: #{tpu_custom_call.1} parent=1 // pred_check
      _
    $region19: #{tpu_custom_call.1} parent=1 // pred_check_branch
      %36 = sbr.rel (0) target = $region21
    $region20: #{tpu_custom_call.1} parent=1 // pred_region
      _
    $region21: #{tpu_custom_call.1} parent=1 // pred_fallthru
      _
    // Predicated region
    $region22: #{tpu_custom_call.1} parent=1 // pred_check
      _
    $region23: #{tpu_custom_call.1} parent=1 // pred_check_branch
      %38 = sbr.rel (0) target = $region25
    $region24: #{tpu_custom_call.1} parent=1 // pred_region
      _
    $region25: #{tpu_custom_call.1} parent=1 // pred_fallthru
      _
    // Predicated region
    $region26: #{tpu_custom_call.1} parent=1 // pred_check
      _
    $region27: #{tpu_custom_call.1} parent=1 // pred_check_branch
      %40 = sbr.rel (0) target = $region29
    $region28: #{tpu_custom_call.1} parent=1 // pred_region
      _
    $region29: #{tpu_custom_call.1} parent=1 // pred_fallthru
      _
    // Predicated region
    $region30: #{tpu_custom_call.1} parent=1 // pred_check
      _
    $region31: #{tpu_custom_call.1} parent=1 // pred_check_branch
      %42 = sbr.rel (0) target = $region33
    $region32: #{tpu_custom_call.1} parent=1 // pred_region
      %s44 = ssub.s32 1024, 1024
      %45 = vsyncadd [#allocation6], %s44
      %s46 = sshll.u32 [#allocation5], 4
      %s47 = int_to_ptr.vmem [resolvable:$true] %s46
      %52 = dma.hbm_to_vmem [thread:$0]  %s7, 1024, %s47, [#allocation6], 64, 64, 4
    $region33: #{tpu_custom_call.1} parent=1 // pred_fallthru
      _
    // Predicated region
    $region34: #{tpu_custom_call.1} parent=1 // pred_check
      _
    $region35: #{tpu_custom_call.1} parent=1 // pred_check_branch
      %54 = sbr.rel (0) target = $region37
    $region36: #{tpu_custom_call.1} parent=1 // pred_region
      _
    $region37: #{tpu_custom_call.1} parent=1 // pred_fallthru
      _
    // Predicated region
    $region38: #{tpu_custom_call.1} parent=1 // pred_check
      _
    $region39: #{tpu_custom_call.1} parent=1 // pred_check_branch
      %56 = sbr.rel (0) target = $region41
    $region40: #{tpu_custom_call.1} parent=1 // pred_region
      %57 = dma.done [#allocation3], 8192
    $region41: #{tpu_custom_call.1} parent=1 // pred_fallthru
      _
    // Predicated region
    $region42: #{tpu_custom_call.1} parent=1 // pred_check
      _
    $region43: #{tpu_custom_call.1} parent=1 // pred_check_branch
      %59 = sbr.rel (0) target = $region45
    $region44: #{tpu_custom_call.1} parent=1 // pred_region
      %60 = dma.done [#allocation6], 1024
    $region45: #{tpu_custom_call.1} parent=1 // pred_fallthru
      _
    %v62 = vld [vmem:[%s0] sm:$0xff]
    %v63 = vld [vmem:[%s0 + $0x8] sm:$0xff]
    %v64 = vld [vmem:[%s0 + $0x10] sm:$0xff]
    %v65 = vld [vmem:[%s0 + $0x18] sm:$0xff]
    %v66 = vld [vmem:[%s0 + $0x20] sm:$0xff]
    %v67 = vld [vmem:[%s0 + $0x28] sm:$0xff]
    %v68 = vld [vmem:[%s0 + $0x30] sm:$0xff]
    %v69 = vld [vmem:[%s0 + $0x38] sm:$0xff]
    %v70 = vld [vmem:[%s0 + $0x40] sm:$0xff]
    %v71 = vpack.c.bf16 %v63, %v62
    %v72 = vpack.c.bf16 %v65, %v64
    %v73 = vpack.c.bf16 %v67, %v66
    %v74 = vpack.c.bf16 %v69, %v68
    %v75 = vpack.c.bf16 %v70, %v70
    %v76 = vld [vmem:[%s1] sm:$0xff]
    %v77 = vld [vmem:[%s1 + $0x8] sm:$0xff]
    %v78 = vld [vmem:[%s1 + $0x10] sm:$0xff]
    %v79 = vld [vmem:[%s1 + $0x18] sm:$0xff]
    %v80 = vld [vmem:[%s1 + $0x20] sm:$0xff]
    %v81 = vld [vmem:[%s1 + $0x28] sm:$0xff]
    %v82 = vld [vmem:[%s1 + $0x30] sm:$0xff]
    %v83 = vld [vmem:[%s1 + $0x38] sm:$0xff]
    %v84 = vld [vmem:[%s1 + $0x40] sm:$0xff]
    %v85 = vld [vmem:[%s1 + $0x48] sm:$0xff]
    %v86 = vld [vmem:[%s1 + $0x50] sm:$0xff]
    %v87 = vld [vmem:[%s1 + $0x58] sm:$0xff]
    %v88 = vld [vmem:[%s1 + $0x60] sm:$0xff]
    %v89 = vld [vmem:[%s1 + $0x68] sm:$0xff]
    %v90 = vld [vmem:[%s1 + $0x70] sm:$0xff]
    %v91 = vld [vmem:[%s1 + $0x78] sm:$0xff]
    %v92 = vld [vmem:[%s2] sm:$0xf]
    %v94 = vlaneseq
    %v95 = vshrl.u32 %v94, 7
    %v96 = vsub.s32 0, %v95
    %v97 = vrot.slane %v92, %v96
    %v98 = vlaneseq
    %v99 = vshrl.u32 %v98, 7
    %v100 = vsub.s32 1, %v99
    %v101 = vrot.slane %v92, %v100
    %v102 = vlaneseq
    %v103 = vshrl.u32 %v102, 7
    %v104 = vsub.s32 2, %v103
    %v105 = vrot.slane %v92, %v104
    %v106 = vlaneseq
    %v107 = vshrl.u32 %v106, 7
    %v108 = vsub.s32 3, %v107
    %v109 = vrot.slane %v92, %v108
    %v130 = vunpack.c.l.b16 %v76
    %v131 = vunpack.c.h.b16 %v76
    %v132 = vunpack.c.l.b16 %v77
    %v133 = vunpack.c.h.b16 %v77
    %v134 = vunpack.c.l.b16 %v78
    %v135 = vunpack.c.h.b16 %v78
    %v136 = vunpack.c.l.b16 %v79
    %v137 = vunpack.c.h.b16 %v79
    %v138 = vunpack.c.l.b16 %v80
    %v139 = vunpack.c.h.b16 %v80
    %v140 = vunpack.c.l.b16 %v81
    %v141 = vunpack.c.h.b16 %v81
    %v142 = vunpack.c.l.b16 %v82
    %v143 = vunpack.c.h.b16 %v82
    %v144 = vunpack.c.l.b16 %v83
    %v145 = vunpack.c.h.b16 %v83
    %v146 = vunpack.c.l.b16 %v84
    %v147 = vunpack.c.h.b16 %v84
    %v148 = vunpack.c.l.b16 %v85
    %v149 = vunpack.c.h.b16 %v85
    %v150 = vunpack.c.l.b16 %v86
    %v151 = vunpack.c.h.b16 %v86
    %v152 = vunpack.c.l.b16 %v87
    %v153 = vunpack.c.h.b16 %v87
    %v154 = vunpack.c.l.b16 %v88
    %v155 = vunpack.c.h.b16 %v88
    %v156 = vunpack.c.l.b16 %v89
    %v157 = vunpack.c.h.b16 %v89
    %v158 = vunpack.c.l.b16 %v90
    %v159 = vunpack.c.h.b16 %v90
    %v160 = vunpack.c.l.b16 %v91
    %v161 = vunpack.c.h.b16 %v91
    %v162 = vpack.c.b16 %v134, %v130
    %v163 = vpack.c.b16 %v135, %v131
    %v164 = vpack.c.b16 %v136, %v132
    %v165 = vpack.c.b16 %v137, %v133
    %v166 = vpack.c.b16 %v142, %v138
    %v167 = vpack.c.b16 %v143, %v139
    %v168 = vpack.c.b16 %v144, %v140
    %v169 = vpack.c.b16 %v145, %v141
    %v170 = vpack.c.b16 %v150, %v146
    %v171 = vpack.c.b16 %v151, %v147
    %v172 = vpack.c.b16 %v152, %v148
    %v173 = vpack.c.b16 %v153, %v149
    %v174 = vpack.c.b16 %v158, %v154
    %v175 = vpack.c.b16 %v159, %v155
    %v176 = vpack.c.b16 %v160, %v156
    %v177 = vpack.c.b16 %v161, %v157
    %vm194 = vcmask 523264
    %v196 = vsel %vm194, %v71, 0
    %v199 = vsel %vm194, %v72, 0
    %v202 = vsel %vm194, %v73, 0
    %v205 = vsel %vm194, %v74, 0
    %v208 = vsel %vm194, %v75, 0
    %210 = vmatprep.subr.bf16.mxu0 %v163
    %211 = vmatpush1.bf16.msra.mxu0 %v162
    %212 = vmatprep.subr.bf16.mxu0 %v167
    %213 = vmatpush1.bf16.msra.mxu0 %v166
    %214 = vmatprep.subr.bf16.mxu0 %v171
    %215 = vmatpush1.bf16.msra.mxu0 %v170
    %216 = vmatprep.subr.bf16.mxu0 %v175
    %217 = vmatpush1.bf16.msra.mxu0 %v174
    %218 = vmatprep.subr.bf16.mxu0 0
    %219 = vmatpush1.bf16.msra.mxu0 0
    %220 = vmatprep.subr.bf16.mxu0 0
    %221 = vmatpush1.bf16.msra.mxu0 0
    %222 = vmatprep.subr.bf16.mxu0 0
    %223 = vmatpush1.bf16.msra.mxu0 0
    %224 = vmatprep.subr.bf16.mxu0 0
    %225 = vmatpush1.bf16.msra.mxu0 0
    %226 = vmatprep.subr.bf16.mxu0 0
    %227 = vmatpush1.bf16.msra.mxu0 0
    %228 = vmatprep.subr.bf16.mxu0 0
    %229 = vmatpush1.bf16.msra.mxu0 0
    %230 = vmatprep.subr.bf16.mxu0 0
    %231 = vmatpush1.bf16.msra.mxu0 0
    %232 = vmatprep.subr.bf16.mxu0 0
    %233 = vmatpush1.bf16.msra.mxu0 0
    %234 = vmatprep.subr.bf16.mxu0 0
    %235 = vmatpush1.bf16.msra.mxu0 0
    %236 = vmatprep.subr.bf16.mxu0 0
    %237 = vmatpush1.bf16.msra.mxu0 0
    %238 = vmatprep.subr.bf16.mxu0 0
    %239 = vmatpush1.bf16.msra.mxu0 0
    %240 = vmatprep.subr.bf16.mxu0 0
    %241 = vmatpush1.bf16.msra.mxu0 0
    %242 = vmatprep.mubr.bf16.mxu0 0
    %243 = vmatmul.mubr.bf16.gmra.mrb[0].mxu0 %v196
    %v244 = vpop.f32.mrb[0].mxu0
    %v245 = vadd.f32 %v97, %v244
    %v246 = vpop.f32.mrb[0].mxu0
    %v247 = vadd.f32 %v101, %v246
    %v248 = vpop.f32.mrb[0].mxu0
    %v249 = vadd.f32 %v97, %v248
    %v250 = vpop.f32.mrb[0].mxu0
    %v251 = vadd.f32 %v101, %v250
    %252 = vmatprep.mubr.bf16.mxu0 0
    %253 = vmatmul.mubr.bf16.gmra.mrb[0].mxu0 %v199
    %v254 = vpop.f32.mrb[0].mxu0
    %v255 = vadd.f32 %v97, %v254
    %v256 = vpop.f32.mrb[0].mxu0
    %v257 = vadd.f32 %v101, %v256
    %v258 = vpop.f32.mrb[0].mxu0
    %v259 = vadd.f32 %v97, %v258
    %v260 = vpop.f32.mrb[0].mxu0
    %v261 = vadd.f32 %v101, %v260
    %262 = vmatprep.mubr.bf16.mxu0 0
    %263 = vmatmul.mubr.bf16.gmra.mrb[0].mxu0 %v202
    %v264 = vpop.f32.mrb[0].mxu0
    %v265 = vadd.f32 %v97, %v264
    %v266 = vpop.f32.mrb[0].mxu0
    %v267 = vadd.f32 %v101, %v266
    %v268 = vpop.f32.mrb[0].mxu0
    %v269 = vadd.f32 %v97, %v268
    %v270 = vpop.f32.mrb[0].mxu0
    %v271 = vadd.f32 %v101, %v270
    %272 = vmatprep.mubr.bf16.mxu0 0
    %273 = vmatmul.mubr.bf16.gmra.mrb[0].mxu0 %v205
    %v274 = vpop.f32.mrb[0].mxu0
    %v275 = vadd.f32 %v97, %v274
    %v276 = vpop.f32.mrb[0].mxu0
    %v277 = vadd.f32 %v101, %v276
    %v278 = vpop.f32.mrb[0].mxu0
    %v279 = vadd.f32 %v97, %v278
    %v280 = vpop.f32.mrb[0].mxu0
    %v281 = vadd.f32 %v101, %v280
    %282 = vmatprep.mubr.bf16.mxu0 0
    %283 = vmatmul.mubr.bf16.gmra.mrb[0].mxu0 %v208
    %v284 = vpop.f32.mrb[0].mxu0
    %v285 = vadd.f32 %v97, %v284
    %v286 = vpop.f32.mrb[0].mxu0
    %v287 = vadd.f32 %v101, %v286
    %v288 = vpop.f32.mrb[0].mxu0
    %v289 = vpop.f32.mrb[0].mxu0
    %290 = vdwg.mxu0
    %291 = vmatprep.subr.bf16.mxu0 %v165
    %292 = vmatpush1.bf16.msra.mxu0 %v164
    %293 = vmatprep.subr.bf16.mxu0 %v169
    %294 = vmatpush1.bf16.msra.mxu0 %v168
    %295 = vmatprep.subr.bf16.mxu0 %v173
    %296 = vmatpush1.bf16.msra.mxu0 %v172
    %297 = vmatprep.subr.bf16.mxu0 %v177
    %298 = vmatpush1.bf16.msra.mxu0 %v176
    %299 = vmatprep.subr.bf16.mxu0 0
    %300 = vmatpush1.bf16.msra.mxu0 0
    %301 = vmatprep.subr.bf16.mxu0 0
    %302 = vmatpush1.bf16.msra.mxu0 0
    %303 = vmatprep.subr.bf16.mxu0 0
    %304 = vmatpush1.bf16.msra.mxu0 0
    %305 = vmatprep.subr.bf16.mxu0 0
    %306 = vmatpush1.bf16.msra.mxu0 0
    %307 = vmatprep.subr.bf16.mxu0 0
    %308 = vmatpush1.bf16.msra.mxu0 0
    %309 = vmatprep.subr.bf16.mxu0 0
    %310 = vmatpush1.bf16.msra.mxu0 0
    %311 = vmatprep.subr.bf16.mxu0 0
    %312 = vmatpush1.bf16.msra.mxu0 0
    %313 = vmatprep.subr.bf16.mxu0 0
    %314 = vmatpush1.bf16.msra.mxu0 0
    %315 = vmatprep.subr.bf16.mxu0 0
    %316 = vmatpush1.bf16.msra.mxu0 0
    %317 = vmatprep.subr.bf16.mxu0 0
    %318 = vmatpush1.bf16.msra.mxu0 0
    %319 = vmatprep.subr.bf16.mxu0 0
    %320 = vmatpush1.bf16.msra.mxu0 0
    %321 = vmatprep.subr.bf16.mxu0 0
    %322 = vmatpush1.bf16.msra.mxu0 0
    %323 = vmatprep.mubr.bf16.mxu0 0
    %324 = vmatmul.mubr.bf16.gmra.mrb[0].mxu0 %v196
    %v325 = vpop.f32.mrb[0].mxu0
    %v326 = vadd.f32 %v105, %v325
    %v327 = vpop.f32.mrb[0].mxu0
    %v328 = vadd.f32 %v109, %v327
    %v329 = vpop.f32.mrb[0].mxu0
    %v330 = vadd.f32 %v105, %v329
    %v331 = vpop.f32.mrb[0].mxu0
    %v332 = vadd.f32 %v109, %v331
    %333 = vmatprep.mubr.bf16.mxu0 0
    %334 = vmatmul.mubr.bf16.gmra.mrb[0].mxu0 %v199
    %v335 = vpop.f32.mrb[0].mxu0
    %v336 = vadd.f32 %v105, %v335
    %v337 = vpop.f32.mrb[0].mxu0
    %v338 = vadd.f32 %v109, %v337
    %v339 = vpop.f32.mrb[0].mxu0
    %v340 = vadd.f32 %v105, %v339
    %v341 = vpop.f32.mrb[0].mxu0
    %v342 = vadd.f32 %v109, %v341
    %343 = vmatprep.mubr.bf16.mxu0 0
    %344 = vmatmul.mubr.bf16.gmra.mrb[0].mxu0 %v202
    %v345 = vpop.f32.mrb[0].mxu0
    %v346 = vadd.f32 %v105, %v345
    %v347 = vpop.f32.mrb[0].mxu0
    %v348 = vadd.f32 %v109, %v347
    %v349 = vpop.f32.mrb[0].mxu0
    %v350 = vadd.f32 %v105, %v349
    %v351 = vpop.f32.mrb[0].mxu0
    %v352 = vadd.f32 %v109, %v351
    %353 = vmatprep.mubr.bf16.mxu0 0
    %354 = vmatmul.mubr.bf16.gmra.mrb[0].mxu0 %v205
    %v355 = vpop.f32.mrb[0].mxu0
    %v356 = vadd.f32 %v105, %v355
    %v357 = vpop.f32.mrb[0].mxu0
    %v358 = vadd.f32 %v109, %v357
    %v359 = vpop.f32.mrb[0].mxu0
    %v360 = vadd.f32 %v105, %v359
    %v361 = vpop.f32.mrb[0].mxu0
    %v362 = vadd.f32 %v109, %v361
    %363 = vmatprep.mubr.bf16.mxu0 0
    %364 = vmatmul.mubr.bf16.gmra.mrb[0].mxu0 %v208
    %v365 = vpop.f32.mrb[0].mxu0
    %v366 = vadd.f32 %v105, %v365
    %v367 = vpop.f32.mrb[0].mxu0
    %v368 = vadd.f32 %v109, %v367
    %v369 = vpop.f32.mrb[0].mxu0
    %v370 = vpop.f32.mrb[0].mxu0
    %371 = vdwg.mxu0
    %v372 = vmul.f32 %v245, %v245
    %v373 = vmul.f32 %v247, %v247
    %v374 = vmul.f32 %v326, %v326
    %v375 = vmul.f32 %v328, %v328
    %v376 = vmul.f32 %v249, %v249
    %v377 = vmul.f32 %v251, %v251
    %v378 = vmul.f32 %v330, %v330
    %v379 = vmul.f32 %v332, %v332
    %v380 = vmul.f32 %v255, %v255
    %v381 = vmul.f32 %v257, %v257
    %v382 = vmul.f32 %v336, %v336
    %v383 = vmul.f32 %v338, %v338
    %v384 = vmul.f32 %v259, %v259
    %v385 = vmul.f32 %v261, %v261
    %v386 = vmul.f32 %v340, %v340
    %v387 = vmul.f32 %v342, %v342
    %v388 = vmul.f32 %v265, %v265
    %v389 = vmul.f32 %v267, %v267
    %v390 = vmul.f32 %v346, %v346
    %v391 = vmul.f32 %v348, %v348
    %v392 = vmul.f32 %v269, %v269
    %v393 = vmul.f32 %v271, %v271
    %v394 = vmul.f32 %v350, %v350
    %v395 = vmul.f32 %v352, %v352
    %v396 = vmul.f32 %v275, %v275
    %v397 = vmul.f32 %v277, %v277
    %v398 = vmul.f32 %v356, %v356
    %v399 = vmul.f32 %v358, %v358
    %v400 = vmul.f32 %v279, %v279
    %v401 = vmul.f32 %v281, %v281
    %v402 = vmul.f32 %v360, %v360
    %v403 = vmul.f32 %v362, %v362
    %v404 = vmul.f32 %v285, %v285
    %v405 = vmul.f32 %v287, %v287
    %v406 = vmul.f32 %v366, %v366
    %v407 = vmul.f32 %v368, %v368
    %v408 = vmul.f32 %v245, %v372
    %v409 = vmul.f32 %v247, %v373
    %v410 = vmul.f32 %v326, %v374
    %v411 = vmul.f32 %v328, %v375
    %v412 = vmul.f32 %v249, %v376
    %v413 = vmul.f32 %v251, %v377
    %v414 = vmul.f32 %v330, %v378
    %v415 = vmul.f32 %v332, %v379
    %v416 = vmul.f32 %v255, %v380
    %v417 = vmul.f32 %v257, %v381
    %v418 = vmul.f32 %v336, %v382
    %v419 = vmul.f32 %v338, %v383
    %v420 = vmul.f32 %v259, %v384
    %v421 = vmul.f32 %v261, %v385
    %v422 = vmul.f32 %v340, %v386
    %v423 = vmul.f32 %v342, %v387
    %v424 = vmul.f32 %v265, %v388
    %v425 = vmul.f32 %v267, %v389
    %v426 = vmul.f32 %v346, %v390
    %v427 = vmul.f32 %v348, %v391
    %v428 = vmul.f32 %v269, %v392
    %v429 = vmul.f32 %v271, %v393
    %v430 = vmul.f32 %v350, %v394
    %v431 = vmul.f32 %v352, %v395
    %v432 = vmul.f32 %v275, %v396
    %v433 = vmul.f32 %v277, %v397
    %v434 = vmul.f32 %v356, %v398
    %v435 = vmul.f32 %v358, %v399
    %v436 = vmul.f32 %v279, %v400
    %v437 = vmul.f32 %v281, %v401
    %v438 = vmul.f32 %v360, %v402
    %v439 = vmul.f32 %v362, %v403
    %v440 = vmul.f32 %v285, %v404
    %v441 = vmul.f32 %v287, %v405
    %v442 = vmul.f32 %v366, %v406
    %v443 = vmul.f32 %v368, %v407
    %v444 = vmul.f32 %v408, 0.044715
    %v445 = vmul.f32 %v409, 0.044715
    %v446 = vmul.f32 %v410, 0.044715
    %v447 = vmul.f32 %v411, 0.044715
    %v448 = vmul.f32 %v412, 0.044715
    %v449 = vmul.f32 %v413, 0.044715
    %v450 = vmul.f32 %v414, 0.044715
    %v451 = vmul.f32 %v415, 0.044715
    %v452 = vmul.f32 %v416, 0.044715
    %v453 = vmul.f32 %v417, 0.044715
    %v454 = vmul.f32 %v418, 0.044715
    %v455 = vmul.f32 %v419, 0.044715
    %v456 = vmul.f32 %v420, 0.044715
    %v457 = vmul.f32 %v421, 0.044715
    %v458 = vmul.f32 %v422, 0.044715
    %v459 = vmul.f32 %v423, 0.044715
    %v460 = vmul.f32 %v424, 0.044715
    %v461 = vmul.f32 %v425, 0.044715
    %v462 = vmul.f32 %v426, 0.044715
    %v463 = vmul.f32 %v427, 0.044715
    %v464 = vmul.f32 %v428, 0.044715
    %v465 = vmul.f32 %v429, 0.044715
    %v466 = vmul.f32 %v430, 0.044715
    %v467 = vmul.f32 %v431, 0.044715
    %v468 = vmul.f32 %v432, 0.044715
    %v469 = vmul.f32 %v433, 0.044715
    %v470 = vmul.f32 %v434, 0.044715
    %v471 = vmul.f32 %v435, 0.044715
    %v472 = vmul.f32 %v436, 0.044715
    %v473 = vmul.f32 %v437, 0.044715
    %v474 = vmul.f32 %v438, 0.044715
    %v475 = vmul.f32 %v439, 0.044715
    %v476 = vmul.f32 %v440, 0.044715
    %v477 = vmul.f32 %v441, 0.044715
    %v478 = vmul.f32 %v442, 0.044715
    %v479 = vmul.f32 %v443, 0.044715
    %v480 = vadd.f32 %v245, %v444
    %v481 = vadd.f32 %v247, %v445
    %v482 = vadd.f32 %v326, %v446
    %v483 = vadd.f32 %v328, %v447
    %v484 = vadd.f32 %v249, %v448
    %v485 = vadd.f32 %v251, %v449
    %v486 = vadd.f32 %v330, %v450
    %v487 = vadd.f32 %v332, %v451
    %v488 = vadd.f32 %v255, %v452
    %v489 = vadd.f32 %v257, %v453
    %v490 = vadd.f32 %v336, %v454
    %v491 = vadd.f32 %v338, %v455
    %v492 = vadd.f32 %v259, %v456
    %v493 = vadd.f32 %v261, %v457
    %v494 = vadd.f32 %v340, %v458
    %v495 = vadd.f32 %v342, %v459
    %v496 = vadd.f32 %v265, %v460
    %v497 = vadd.f32 %v267, %v461
    %v498 = vadd.f32 %v346, %v462
    %v499 = vadd.f32 %v348, %v463
    %v500 = vadd.f32 %v269, %v464
    %v501 = vadd.f32 %v271, %v465
    %v502 = vadd.f32 %v350, %v466
    %v503 = vadd.f32 %v352, %v467
    %v504 = vadd.f32 %v275, %v468
    %v505 = vadd.f32 %v277, %v469
    %v506 = vadd.f32 %v356, %v470
    %v507 = vadd.f32 %v358, %v471
    %v508 = vadd.f32 %v279, %v472
    %v509 = vadd.f32 %v281, %v473
    %v510 = vadd.f32 %v360, %v474
    %v511 = vadd.f32 %v362, %v475
    %v512 = vadd.f32 %v285, %v476
    %v513 = vadd.f32 %v287, %v477
    %v514 = vadd.f32 %v366, %v478
    %v515 = vadd.f32 %v368, %v479
    %v516 = vmul.f32 %v480, 0.7978846
    %v517 = vmul.f32 %v481, 0.7978846
    %v518 = vmul.f32 %v482, 0.7978846
    %v519 = vmul.f32 %v483, 0.7978846
    %v520 = vmul.f32 %v484, 0.7978846
    %v521 = vmul.f32 %v485, 0.7978846
    %v522 = vmul.f32 %v486, 0.7978846
    %v523 = vmul.f32 %v487, 0.7978846
    %v524 = vmul.f32 %v488, 0.7978846
    %v525 = vmul.f32 %v489, 0.7978846
    %v526 = vmul.f32 %v490, 0.7978846
    %v527 = vmul.f32 %v491, 0.7978846
    %v528 = vmul.f32 %v492, 0.7978846
    %v529 = vmul.f32 %v493, 0.7978846
    %v530 = vmul.f32 %v494, 0.7978846
    %v531 = vmul.f32 %v495, 0.7978846
    %v532 = vmul.f32 %v496, 0.7978846
    %v533 = vmul.f32 %v497, 0.7978846
    %v534 = vmul.f32 %v498, 0.7978846
    %v535 = vmul.f32 %v499, 0.7978846
    %v536 = vmul.f32 %v500, 0.7978846
    %v537 = vmul.f32 %v501, 0.7978846
    %v538 = vmul.f32 %v502, 0.7978846
    %v539 = vmul.f32 %v503, 0.7978846
    %v540 = vmul.f32 %v504, 0.7978846
    %v541 = vmul.f32 %v505, 0.7978846
    %v542 = vmul.f32 %v506, 0.7978846
    %v543 = vmul.f32 %v507, 0.7978846
    %v544 = vmul.f32 %v508, 0.7978846
    %v545 = vmul.f32 %v509, 0.7978846
    %v546 = vmul.f32 %v510, 0.7978846
    %v547 = vmul.f32 %v511, 0.7978846
    %v548 = vmul.f32 %v512, 0.7978846
    %v549 = vmul.f32 %v513, 0.7978846
    %v550 = vmul.f32 %v514, 0.7978846
    %v551 = vmul.f32 %v515, 0.7978846
    %v552 = vtanh.pop %v516
    %v553 = vtanh.pop %v517
    %v554 = vtanh.pop %v518
    %v555 = vtanh.pop %v519
    %v556 = vtanh.pop %v520
    %v557 = vtanh.pop %v521
    %v558 = vtanh.pop %v522
    %v559 = vtanh.pop %v523
    %v560 = vtanh.pop %v524
    %v561 = vtanh.pop %v525
    %v562 = vtanh.pop %v526
    %v563 = vtanh.pop %v527
    %v564 = vtanh.pop %v528
    %v565 = vtanh.pop %v529
    %v566 = vtanh.pop %v530
    %v567 = vtanh.pop %v531
    %v568 = vtanh.pop %v532
    %v569 = vtanh.pop %v533
    %v570 = vtanh.pop %v534
    %v571 = vtanh.pop %v535
    %v572 = vtanh.pop %v536
    %v573 = vtanh.pop %v537
    %v574 = vtanh.pop %v538
    %v575 = vtanh.pop %v539
    %v576 = vtanh.pop %v540
    %v577 = vtanh.pop %v541
    %v578 = vtanh.pop %v542
    %v579 = vtanh.pop %v543
    %v580 = vtanh.pop %v544
    %v581 = vtanh.pop %v545
    %v582 = vtanh.pop %v546
    %v583 = vtanh.pop %v547
    %v584 = vtanh.pop %v548
    %v585 = vtanh.pop %v549
    %v586 = vtanh.pop %v550
    %v587 = vtanh.pop %v551
    %v588 = vadd.f32 %v552, 1.0
    %v589 = vadd.f32 %v553, 1.0
    %v590 = vadd.f32 %v554, 1.0
    %v591 = vadd.f32 %v555, 1.0
    %v592 = vadd.f32 %v556, 1.0
    %v593 = vadd.f32 %v557, 1.0
    %v594 = vadd.f32 %v558, 1.0
    %v595 = vadd.f32 %v559, 1.0
    %v596 = vadd.f32 %v560, 1.0
    %v597 = vadd.f32 %v561, 1.0
    %v598 = vadd.f32 %v562, 1.0
    %v599 = vadd.f32 %v563, 1.0
    %v600 = vadd.f32 %v564, 1.0
    %v601 = vadd.f32 %v565, 1.0
    %v602 = vadd.f32 %v566, 1.0
    %v603 = vadd.f32 %v567, 1.0
    %v604 = vadd.f32 %v568, 1.0
    %v605 = vadd.f32 %v569, 1.0
    %v606 = vadd.f32 %v570, 1.0
    %v607 = vadd.f32 %v571, 1.0
    %v608 = vadd.f32 %v572, 1.0
    %v609 = vadd.f32 %v573, 1.0
    %v610 = vadd.f32 %v574, 1.0
    %v611 = vadd.f32 %v575, 1.0
    %v612 = vadd.f32 %v576, 1.0
    %v613 = vadd.f32 %v577, 1.0
    %v614 = vadd.f32 %v578, 1.0
    %v615 = vadd.f32 %v579, 1.0
    %v616 = vadd.f32 %v580, 1.0
    %v617 = vadd.f32 %v581, 1.0
    %v618 = vadd.f32 %v582, 1.0
    %v619 = vadd.f32 %v583, 1.0
    %v620 = vadd.f32 %v584, 1.0
    %v621 = vadd.f32 %v585, 1.0
    %v622 = vadd.f32 %v586, 1.0
    %v623 = vadd.f32 %v587, 1.0
    %v624 = vmul.f32 %v588, 0.5
    %v625 = vmul.f32 %v589, 0.5
    %v626 = vmul.f32 %v590, 0.5
    %v627 = vmul.f32 %v591, 0.5
    %v628 = vmul.f32 %v592, 0.5
    %v629 = vmul.f32 %v593, 0.5
    %v630 = vmul.f32 %v594, 0.5
    %v631 = vmul.f32 %v595, 0.5
    %v632 = vmul.f32 %v596, 0.5
    %v633 = vmul.f32 %v597, 0.5
    %v634 = vmul.f32 %v598, 0.5
    %v635 = vmul.f32 %v599, 0.5
    %v636 = vmul.f32 %v600, 0.5
    %v637 = vmul.f32 %v601, 0.5
    %v638 = vmul.f32 %v602, 0.5
    %v639 = vmul.f32 %v603, 0.5
    %v640 = vmul.f32 %v604, 0.5
    %v641 = vmul.f32 %v605, 0.5
    %v642 = vmul.f32 %v606, 0.5
    %v643 = vmul.f32 %v607, 0.5
    %v644 = vmul.f32 %v608, 0.5
    %v645 = vmul.f32 %v609, 0.5
    %v646 = vmul.f32 %v610, 0.5
    %v647 = vmul.f32 %v611, 0.5
    %v648 = vmul.f32 %v612, 0.5
    %v649 = vmul.f32 %v613, 0.5
    %v650 = vmul.f32 %v614, 0.5
    %v651 = vmul.f32 %v615, 0.5
    %v652 = vmul.f32 %v616, 0.5
    %v653 = vmul.f32 %v617, 0.5
    %v654 = vmul.f32 %v618, 0.5
    %v655 = vmul.f32 %v619, 0.5
    %v656 = vmul.f32 %v620, 0.5
    %v657 = vmul.f32 %v621, 0.5
    %v658 = vmul.f32 %v622, 0.5
    %v659 = vmul.f32 %v623, 0.5
    %v660 = vmul.f32 %v245, %v624
    %v661 = vmul.f32 %v247, %v625
    %v662 = vmul.f32 %v326, %v626
    %v663 = vmul.f32 %v328, %v627
    %v664 = vmul.f32 %v249, %v628
    %v665 = vmul.f32 %v251, %v629
    %v666 = vmul.f32 %v330, %v630
    %v667 = vmul.f32 %v332, %v631
    %v668 = vmul.f32 %v255, %v632
    %v669 = vmul.f32 %v257, %v633
    %v670 = vmul.f32 %v336, %v634
    %v671 = vmul.f32 %v338, %v635
    %v672 = vmul.f32 %v259, %v636
    %v673 = vmul.f32 %v261, %v637
    %v674 = vmul.f32 %v340, %v638
    %v675 = vmul.f32 %v342, %v639
    %v676 = vmul.f32 %v265, %v640
    %v677 = vmul.f32 %v267, %v641
    %v678 = vmul.f32 %v346, %v642
    %v679 = vmul.f32 %v348, %v643
    %v680 = vmul.f32 %v269, %v644
    %v681 = vmul.f32 %v271, %v645
    %v682 = vmul.f32 %v350, %v646
    %v683 = vmul.f32 %v352, %v647
    %v684 = vmul.f32 %v275, %v648
    %v685 = vmul.f32 %v277, %v649
    %v686 = vmul.f32 %v356, %v650
    %v687 = vmul.f32 %v358, %v651
    %v688 = vmul.f32 %v279, %v652
    %v689 = vmul.f32 %v281, %v653
    %v690 = vmul.f32 %v360, %v654
    %v691 = vmul.f32 %v362, %v655
    %v692 = vmul.f32 %v285, %v656
    %v693 = vmul.f32 %v287, %v657
    %v694 = vmul.f32 %v366, %v658
    %v695 = vmul.f32 %v368, %v659
    %v696 = vpack.c.bf16 %v664, %v660
    %v697 = vpack.c.bf16 %v665, %v661
    %v698 = vpack.c.bf16 %v666, %v662
    %v699 = vpack.c.bf16 %v667, %v663
    %v700 = vpack.c.bf16 %v672, %v668
    %v701 = vpack.c.bf16 %v673, %v669
    %v702 = vpack.c.bf16 %v674, %v670
    %v703 = vpack.c.bf16 %v675, %v671
    %v704 = vpack.c.bf16 %v680, %v676
    %v705 = vpack.c.bf16 %v681, %v677
    %v706 = vpack.c.bf16 %v682, %v678
    %v707 = vpack.c.bf16 %v683, %v679
    %v708 = vpack.c.bf16 %v688, %v684
    %v709 = vpack.c.bf16 %v689, %v685
    %v710 = vpack.c.bf16 %v690, %v686
    %v711 = vpack.c.bf16 %v691, %v687
    %v712 = vpack.c.bf16 %v692, %v692
    %v713 = vpack.c.bf16 %v693, %v693
    %v714 = vpack.c.bf16 %v694, %v694
    %v715 = vpack.c.bf16 %v695, %v695
    %v716 = vld [vmem:[#allocation2] sm:$0xff]
    %v717 = vld [vmem:[#allocation2 + $0x8] sm:$0xff]
    %v718 = vld [vmem:[#allocation2 + $0x10] sm:$0xff]
    %v719 = vld [vmem:[#allocation2 + $0x18] sm:$0xff]
    %v720 = vld [vmem:[#allocation2 + $0x20] sm:$0xff]
    %v721 = vld [vmem:[#allocation2 + $0x28] sm:$0xff]
    %v722 = vld [vmem:[#allocation2 + $0x30] sm:$0xff]
    %v723 = vld [vmem:[#allocation2 + $0x38] sm:$0xff]
    %v724 = vld [vmem:[#allocation2 + $0x40] sm:$0xff]
    %v725 = vld [vmem:[#allocation2 + $0x48] sm:$0xff]
    %v726 = vld [vmem:[#allocation2 + $0x50] sm:$0xff]
    %v727 = vld [vmem:[#allocation2 + $0x58] sm:$0xff]
    %v728 = vld [vmem:[#allocation2 + $0x60] sm:$0xff]
    %v729 = vld [vmem:[#allocation2 + $0x68] sm:$0xff]
    %v730 = vld [vmem:[#allocation2 + $0x70] sm:$0xff]
    %v731 = vld [vmem:[#allocation2 + $0x78] sm:$0xff]
    %v732 = vld [vmem:[#allocation2 + $0x80] sm:$0xff]
    %v733 = vld [vmem:[#allocation2 + $0x88] sm:$0xff]
    %v734 = vld [vmem:[#allocation2 + $0x90] sm:$0xff]
    %v735 = vld [vmem:[#allocation2 + $0x98] sm:$0xff]
    %v736 = vld [vmem:[#allocation2 + $0xa0] sm:$0xff]
    %v737 = vld [vmem:[#allocation2 + $0xa8] sm:$0xff]
    %v738 = vld [vmem:[#allocation2 + $0xb0] sm:$0xff]
    %v739 = vld [vmem:[#allocation2 + $0xb8] sm:$0xff]
    %v740 = vld [vmem:[#allocation2 + $0xc0] sm:$0xff]
    %v741 = vld [vmem:[#allocation2 + $0xc8] sm:$0xff]
    %v742 = vld [vmem:[#allocation2 + $0xd0] sm:$0xff]
    %v743 = vld [vmem:[#allocation2 + $0xd8] sm:$0xff]
    %v744 = vld [vmem:[#allocation2 + $0xe0] sm:$0xff]
    %v745 = vld [vmem:[#allocation2 + $0xe8] sm:$0xff]
    %v746 = vld [vmem:[#allocation2 + $0xf0] sm:$0xff]
    %v747 = vld [vmem:[#allocation2 + $0xf8] sm:$0xff]
    %v748 = vld [vmem:[#allocation2 + $0x100] sm:$0xff]
    %v749 = vld [vmem:[#allocation2 + $0x108] sm:$0xff]
    %v750 = vld [vmem:[#allocation2 + $0x110] sm:$0xff]
    %v751 = vld [vmem:[#allocation2 + $0x118] sm:$0xff]
    %v752 = vld [vmem:[#allocation2 + $0x120] sm:$0xff]
    %v753 = vld [vmem:[#allocation2 + $0x128] sm:$0xff]
    %v754 = vld [vmem:[#allocation2 + $0x130] sm:$0xff]
    %v755 = vld [vmem:[#allocation2 + $0x138] sm:$0xff]
    %v756 = vld [vmem:[#allocation2 + $0x140] sm:$0xff]
    %v757 = vld [vmem:[#allocation2 + $0x148] sm:$0xff]
    %v758 = vld [vmem:[#allocation2 + $0x150] sm:$0xff]
    %v759 = vld [vmem:[#allocation2 + $0x158] sm:$0xff]
    %v760 = vld [vmem:[#allocation2 + $0x160] sm:$0xff]
    %v761 = vld [vmem:[#allocation2 + $0x168] sm:$0xff]
    %v762 = vld [vmem:[#allocation2 + $0x170] sm:$0xff]
    %v763 = vld [vmem:[#allocation2 + $0x178] sm:$0xff]
    %v764 = vld [vmem:[#allocation2 + $0x180] sm:$0xff]
    %v765 = vld [vmem:[#allocation2 + $0x188] sm:$0xff]
    %v766 = vld [vmem:[#allocation2 + $0x190] sm:$0xff]
    %v767 = vld [vmem:[#allocation2 + $0x198] sm:$0xff]
    %v768 = vld [vmem:[#allocation2 + $0x1a0] sm:$0xff]
    %v769 = vld [vmem:[#allocation2 + $0x1a8] sm:$0xff]
    %v770 = vld [vmem:[#allocation2 + $0x1b0] sm:$0xff]
    %v771 = vld [vmem:[#allocation2 + $0x1b8] sm:$0xff]
    %v772 = vld [vmem:[#allocation2 + $0x1c0] sm:$0xff]
    %v773 = vld [vmem:[#allocation2 + $0x1c8] sm:$0xff]
    %v774 = vld [vmem:[#allocation2 + $0x1d0] sm:$0xff]
    %v775 = vld [vmem:[#allocation2 + $0x1d8] sm:$0xff]
    %v776 = vld [vmem:[#allocation2 + $0x1e0] sm:$0xff]
    %v777 = vld [vmem:[#allocation2 + $0x1e8] sm:$0xff]
    %v778 = vld [vmem:[#allocation2 + $0x1f0] sm:$0xff]
    %v779 = vld [vmem:[#allocation2 + $0x1f8] sm:$0xff]
    %v844 = vunpack.c.l.b16 %v716
    %v845 = vunpack.c.h.b16 %v716
    %v846 = vunpack.c.l.b16 %v717
    %v847 = vunpack.c.h.b16 %v717
    %v848 = vunpack.c.l.b16 %v718
    %v849 = vunpack.c.h.b16 %v718
    %v850 = vunpack.c.l.b16 %v719
    %v851 = vunpack.c.h.b16 %v719
    %v852 = vunpack.c.l.b16 %v720
    %v853 = vunpack.c.h.b16 %v720
    %v854 = vunpack.c.l.b16 %v721
    %v855 = vunpack.c.h.b16 %v721
    %v856 = vunpack.c.l.b16 %v722
    %v857 = vunpack.c.h.b16 %v722
    %v858 = vunpack.c.l.b16 %v723
    %v859 = vunpack.c.h.b16 %v723
    %v860 = vunpack.c.l.b16 %v724
    %v861 = vunpack.c.h.b16 %v724
    %v862 = vunpack.c.l.b16 %v725
    %v863 = vunpack.c.h.b16 %v725
    %v864 = vunpack.c.l.b16 %v726
    %v865 = vunpack.c.h.b16 %v726
    %v866 = vunpack.c.l.b16 %v727
    %v867 = vunpack.c.h.b16 %v727
    %v868 = vunpack.c.l.b16 %v728
    %v869 = vunpack.c.h.b16 %v728
    %v870 = vunpack.c.l.b16 %v729
    %v871 = vunpack.c.h.b16 %v729
    %v872 = vunpack.c.l.b16 %v730
    %v873 = vunpack.c.h.b16 %v730
    %v874 = vunpack.c.l.b16 %v731
    %v875 = vunpack.c.h.b16 %v731
    %v876 = vunpack.c.l.b16 %v732
    %v877 = vunpack.c.h.b16 %v732
    %v878 = vunpack.c.l.b16 %v733
    %v879 = vunpack.c.h.b16 %v733
    %v880 = vunpack.c.l.b16 %v734
    %v881 = vunpack.c.h.b16 %v734
    %v882 = vunpack.c.l.b16 %v735
    %v883 = vunpack.c.h.b16 %v735
    %v884 = vunpack.c.l.b16 %v736
    %v885 = vunpack.c.h.b16 %v736
    %v886 = vunpack.c.l.b16 %v737
    %v887 = vunpack.c.h.b16 %v737
    %v888 = vunpack.c.l.b16 %v738
    %v889 = vunpack.c.h.b16 %v738
    %v890 = vunpack.c.l.b16 %v739
    %v891 = vunpack.c.h.b16 %v739
    %v892 = vunpack.c.l.b16 %v740
    %v893 = vunpack.c.h.b16 %v740
    %v894 = vunpack.c.l.b16 %v741
    %v895 = vunpack.c.h.b16 %v741
    %v896 = vunpack.c.l.b16 %v742
    %v897 = vunpack.c.h.b16 %v742
    %v898 = vunpack.c.l.b16 %v743
    %v899 = vunpack.c.h.b16 %v743
    %v900 = vunpack.c.l.b16 %v744
    %v901 = vunpack.c.h.b16 %v744
    %v902 = vunpack.c.l.b16 %v745
    %v903 = vunpack.c.h.b16 %v745
    %v904 = vunpack.c.l.b16 %v746
    %v905 = vunpack.c.h.b16 %v746
    %v906 = vunpack.c.l.b16 %v747
    %v907 = vunpack.c.h.b16 %v747
    %v908 = vunpack.c.l.b16 %v748
    %v909 = vunpack.c.h.b16 %v748
    %v910 = vunpack.c.l.b16 %v749
    %v911 = vunpack.c.h.b16 %v749
    %v912 = vunpack.c.l.b16 %v750
    %v913 = vunpack.c.h.b16 %v750
    %v914 = vunpack.c.l.b16 %v751
    %v915 = vunpack.c.h.b16 %v751
    %v916 = vunpack.c.l.b16 %v752
    %v917 = vunpack.c.h.b16 %v752
    %v918 = vunpack.c.l.b16 %v753
    %v919 = vunpack.c.h.b16 %v753
    %v920 = vunpack.c.l.b16 %v754
    %v921 = vunpack.c.h.b16 %v754
    %v922 = vunpack.c.l.b16 %v755
    %v923 = vunpack.c.h.b16 %v755
    %v924 = vunpack.c.l.b16 %v756
    %v925 = vunpack.c.h.b16 %v756
    %v926 = vunpack.c.l.b16 %v757
    %v927 = vunpack.c.h.b16 %v757
    %v928 = vunpack.c.l.b16 %v758
    %v929 = vunpack.c.h.b16 %v758
    %v930 = vunpack.c.l.b16 %v759
    %v931 = vunpack.c.h.b16 %v759
    %v932 = vunpack.c.l.b16 %v760
    %v933 = vunpack.c.h.b16 %v760
    %v934 = vunpack.c.l.b16 %v761
    %v935 = vunpack.c.h.b16 %v761
    %v936 = vunpack.c.l.b16 %v762
    %v937 = vunpack.c.h.b16 %v762
    %v938 = vunpack.c.l.b16 %v763
    %v939 = vunpack.c.h.b16 %v763
    %v940 = vunpack.c.l.b16 %v764
    %v941 = vunpack.c.h.b16 %v764
    %v942 = vunpack.c.l.b16 %v765
    %v943 = vunpack.c.h.b16 %v765
    %v944 = vunpack.c.l.b16 %v766
    %v945 = vunpack.c.h.b16 %v766
    %v946 = vunpack.c.l.b16 %v767
    %v947 = vunpack.c.h.b16 %v767
    %v948 = vunpack.c.l.b16 %v768
    %v949 = vunpack.c.h.b16 %v768
    %v950 = vunpack.c.l.b16 %v769
    %v951 = vunpack.c.h.b16 %v769
    %v952 = vunpack.c.l.b16 %v770
    %v953 = vunpack.c.h.b16 %v770
    %v954 = vunpack.c.l.b16 %v771
    %v955 = vunpack.c.h.b16 %v771
    %v956 = vunpack.c.l.b16 %v772
    %v957 = vunpack.c.h.b16 %v772
    %v958 = vunpack.c.l.b16 %v773
    %v959 = vunpack.c.h.b16 %v773
    %v960 = vunpack.c.l.b16 %v774
    %v961 = vunpack.c.h.b16 %v774
    %v962 = vunpack.c.l.b16 %v775
    %v963 = vunpack.c.h.b16 %v775
    %v964 = vunpack.c.l.b16 %v776
    %v965 = vunpack.c.h.b16 %v776
    %v966 = vunpack.c.l.b16 %v777
    %v967 = vunpack.c.h.b16 %v777
    %v968 = vunpack.c.l.b16 %v778
    %v969 = vunpack.c.h.b16 %v778
    %v970 = vunpack.c.l.b16 %v779
    %v971 = vunpack.c.h.b16 %v779
    %v972 = vpack.c.b16 %v846, %v844
    %v973 = vpack.c.b16 %v847, %v845
    %v974 = vpack.c.b16 %v850, %v848
    %v975 = vpack.c.b16 %v851, %v849
    %v976 = vpack.c.b16 %v854, %v852
    %v977 = vpack.c.b16 %v855, %v853
    %v978 = vpack.c.b16 %v858, %v856
    %v979 = vpack.c.b16 %v859, %v857
    %v980 = vpack.c.b16 %v862, %v860
    %v981 = vpack.c.b16 %v863, %v861
    %v982 = vpack.c.b16 %v866, %v864
    %v983 = vpack.c.b16 %v867, %v865
    %v984 = vpack.c.b16 %v870, %v868
    %v985 = vpack.c.b16 %v871, %v869
    %v986 = vpack.c.b16 %v874, %v872
    %v987 = vpack.c.b16 %v875, %v873
    %v988 = vpack.c.b16 %v878, %v876
    %v989 = vpack.c.b16 %v879, %v877
    %v990 = vpack.c.b16 %v882, %v880
    %v991 = vpack.c.b16 %v883, %v881
    %v992 = vpack.c.b16 %v886, %v884
    %v993 = vpack.c.b16 %v887, %v885
    %v994 = vpack.c.b16 %v890, %v888
    %v995 = vpack.c.b16 %v891, %v889
    %v996 = vpack.c.b16 %v894, %v892
    %v997 = vpack.c.b16 %v895, %v893
    %v998 = vpack.c.b16 %v898, %v896
    %v999 = vpack.c.b16 %v899, %v897
    %v1000 = vpack.c.b16 %v902, %v900
    %v1001 = vpack.c.b16 %v903, %v901
    %v1002 = vpack.c.b16 %v906, %v904
    %v1003 = vpack.c.b16 %v907, %v905
    %v1004 = vpack.c.b16 %v910, %v908
    %v1005 = vpack.c.b16 %v911, %v909
    %v1006 = vpack.c.b16 %v914, %v912
    %v1007 = vpack.c.b16 %v915, %v913
    %v1008 = vpack.c.b16 %v918, %v916
    %v1009 = vpack.c.b16 %v919, %v917
    %v1010 = vpack.c.b16 %v922, %v920
    %v1011 = vpack.c.b16 %v923, %v921
    %v1012 = vpack.c.b16 %v926, %v924
    %v1013 = vpack.c.b16 %v927, %v925
    %v1014 = vpack.c.b16 %v930, %v928
    %v1015 = vpack.c.b16 %v931, %v929
    %v1016 = vpack.c.b16 %v934, %v932
    %v1017 = vpack.c.b16 %v935, %v933
    %v1018 = vpack.c.b16 %v938, %v936
    %v1019 = vpack.c.b16 %v939, %v937
    %v1020 = vpack.c.b16 %v942, %v940
    %v1021 = vpack.c.b16 %v943, %v941
    %v1022 = vpack.c.b16 %v946, %v944
    %v1023 = vpack.c.b16 %v947, %v945
    %v1024 = vpack.c.b16 %v950, %v948
    %v1025 = vpack.c.b16 %v951, %v949
    %v1026 = vpack.c.b16 %v954, %v952
    %v1027 = vpack.c.b16 %v955, %v953
    %v1028 = vpack.c.b16 %v958, %v956
    %v1029 = vpack.c.b16 %v959, %v957
    %v1030 = vpack.c.b16 %v962, %v960
    %v1031 = vpack.c.b16 %v963, %v961
    %v1032 = vpack.c.b16 %v966, %v964
    %v1033 = vpack.c.b16 %v967, %v965
    %v1034 = vpack.c.b16 %v970, %v968
    %v1035 = vpack.c.b16 %v971, %v969
    %1100 = vmatprep.subr.bf16.mxu0 %v973
    %1101 = vmatpush1.bf16.msra.mxu0 %v972
    %1102 = vmatprep.subr.bf16.mxu0 %v975
    %1103 = vmatpush1.bf16.msra.mxu0 %v974
    %1104 = vmatprep.subr.bf16.mxu0 %v977
    %1105 = vmatpush1.bf16.msra.mxu0 %v976
    %1106 = vmatprep.subr.bf16.mxu0 %v979
    %1107 = vmatpush1.bf16.msra.mxu0 %v978
    %1108 = vmatprep.subr.bf16.mxu0 %v981
    %1109 = vmatpush1.bf16.msra.mxu0 %v980
    %1110 = vmatprep.subr.bf16.mxu0 %v983
    %1111 = vmatpush1.bf16.msra.mxu0 %v982
    %1112 = vmatprep.subr.bf16.mxu0 %v985
    %1113 = vmatpush1.bf16.msra.mxu0 %v984
    %1114 = vmatprep.subr.bf16.mxu0 %v987
    %1115 = vmatpush1.bf16.msra.mxu0 %v986
    %1116 = vmatprep.subr.bf16.mxu0 %v989
    %1117 = vmatpush1.bf16.msra.mxu0 %v988
    %1118 = vmatprep.subr.bf16.mxu0 %v991
    %1119 = vmatpush1.bf16.msra.mxu0 %v990
    %1120 = vmatprep.subr.bf16.mxu0 %v993
    %1121 = vmatpush1.bf16.msra.mxu0 %v992
    %1122 = vmatprep.subr.bf16.mxu0 %v995
    %1123 = vmatpush1.bf16.msra.mxu0 %v994
    %1124 = vmatprep.subr.bf16.mxu0 %v997
    %1125 = vmatpush1.bf16.msra.mxu0 %v996
    %1126 = vmatprep.subr.bf16.mxu0 %v999
    %1127 = vmatpush1.bf16.msra.mxu0 %v998
    %1128 = vmatprep.subr.bf16.mxu0 %v1001
    %1129 = vmatpush1.bf16.msra.mxu0 %v1000
    %1130 = vmatprep.subr.bf16.mxu0 %v1003
    %1131 = vmatpush1.bf16.msra.mxu0 %v1002
    %1132 = vmatprep.mubr.bf16.mxu0 %v697
    %1133 = vmatmul.mubr.bf16.gmra.mrb[0].mxu0 %v696
    %v1134 = vpop.f32.mrb[0].mxu0
    %v1135 = vadd.f32 0.0, %v1134
    %v1136 = vpop.f32.mrb[0].mxu0
    %v1137 = vadd.f32 0.0, %v1136
    %v1138 = vpop.f32.mrb[0].mxu0
    %v1139 = vadd.f32 0.0, %v1138
    %v1140 = vpop.f32.mrb[0].mxu0
    %v1141 = vadd.f32 0.0, %v1140
    %1142 = vmatprep.mubr.bf16.mxu0 %v701
    %1143 = vmatmul.mubr.bf16.gmra.mrb[0].mxu0 %v700
    %v1144 = vpop.f32.mrb[0].mxu0
    %v1145 = vadd.f32 0.0, %v1144
    %v1146 = vpop.f32.mrb[0].mxu0
    %v1147 = vadd.f32 0.0, %v1146
    %v1148 = vpop.f32.mrb[0].mxu0
    %v1149 = vadd.f32 0.0, %v1148
    %v1150 = vpop.f32.mrb[0].mxu0
    %v1151 = vadd.f32 0.0, %v1150
    %1152 = vmatprep.mubr.bf16.mxu0 %v705
    %1153 = vmatmul.mubr.bf16.gmra.mrb[0].mxu0 %v704
    %v1154 = vpop.f32.mrb[0].mxu0
    %v1155 = vadd.f32 0.0, %v1154
    %v1156 = vpop.f32.mrb[0].mxu0
    %v1157 = vadd.f32 0.0, %v1156
    %v1158 = vpop.f32.mrb[0].mxu0
    %v1159 = vadd.f32 0.0, %v1158
    %v1160 = vpop.f32.mrb[0].mxu0
    %v1161 = vadd.f32 0.0, %v1160
    %1162 = vmatprep.mubr.bf16.mxu0 %v709
    %1163 = vmatmul.mubr.bf16.gmra.mrb[0].mxu0 %v708
    %v1164 = vpop.f32.mrb[0].mxu0
    %v1165 = vadd.f32 0.0, %v1164
    %v1166 = vpop.f32.mrb[0].mxu0
    %v1167 = vadd.f32 0.0, %v1166
    %v1168 = vpop.f32.mrb[0].mxu0
    %v1169 = vadd.f32 0.0, %v1168
    %v1170 = vpop.f32.mrb[0].mxu0
    %v1171 = vadd.f32 0.0, %v1170
    %1172 = vmatprep.mubr.bf16.mxu0 %v713
    %1173 = vmatmul.mubr.bf16.gmra.mrb[0].mxu0 %v712
    %v1174 = vpop.f32.mrb[0].mxu0
    %v1175 = vpop.f32.mrb[0].mxu0
    %v1176 = vadd.f32 0.0, %v1175
    %v1177 = vpop.f32.mrb[0].mxu0
    %v1178 = vpop.f32.mrb[0].mxu0
    %1179 = vdwg.mxu0
    %1180 = vmatprep.subr.bf16.mxu0 %v1005
    %1181 = vmatpush1.bf16.msra.mxu0 %v1004
    %1182 = vmatprep.subr.bf16.mxu0 %v1007
    %1183 = vmatpush1.bf16.msra.mxu0 %v1006
    %1184 = vmatprep.subr.bf16.mxu0 %v1009
    %1185 = vmatpush1.bf16.msra.mxu0 %v1008
    %1186 = vmatprep.subr.bf16.mxu0 %v1011
    %1187 = vmatpush1.bf16.msra.mxu0 %v1010
    %1188 = vmatprep.subr.bf16.mxu0 %v1013
    %1189 = vmatpush1.bf16.msra.mxu0 %v1012
    %1190 = vmatprep.subr.bf16.mxu0 %v1015
    %1191 = vmatpush1.bf16.msra.mxu0 %v1014
    %1192 = vmatprep.subr.bf16.mxu0 %v1017
    %1193 = vmatpush1.bf16.msra.mxu0 %v1016
    %1194 = vmatprep.subr.bf16.mxu0 %v1019
    %1195 = vmatpush1.bf16.msra.mxu0 %v1018
    %1196 = vmatprep.subr.bf16.mxu0 %v1021
    %1197 = vmatpush1.bf16.msra.mxu0 %v1020
    %1198 = vmatprep.subr.bf16.mxu0 %v1023
    %1199 = vmatpush1.bf16.msra.mxu0 %v1022
    %1200 = vmatprep.subr.bf16.mxu0 %v1025
    %1201 = vmatpush1.bf16.msra.mxu0 %v1024
    %1202 = vmatprep.subr.bf16.mxu0 %v1027
    %1203 = vmatpush1.bf16.msra.mxu0 %v1026
    %1204 = vmatprep.subr.bf16.mxu0 %v1029
    %1205 = vmatpush1.bf16.msra.mxu0 %v1028
    %1206 = vmatprep.subr.bf16.mxu0 %v1031
    %1207 = vmatpush1.bf16.msra.mxu0 %v1030
    %1208 = vmatprep.subr.bf16.mxu0 %v1033
    %1209 = vmatpush1.bf16.msra.mxu0 %v1032
    %1210 = vmatprep.subr.bf16.mxu0 %v1035
    %1211 = vmatpush1.bf16.msra.mxu0 %v1034
    %1212 = vmatprep.mubr.bf16.mxu0 %v699
    %1213 = vmatmul.mubr.bf16.gmra.mrb[0].mxu0 %v698
    %v1214 = vpop.f32.mrb[0].mxu0
    %v1215 = vadd.f32 %v1135, %v1214
    %v1216 = vpop.f32.mrb[0].mxu0
    %v1217 = vadd.f32 %v1137, %v1216
    %v1218 = vpop.f32.mrb[0].mxu0
    %v1219 = vadd.f32 %v1139, %v1218
    %v1220 = vpop.f32.mrb[0].mxu0
    %v1221 = vadd.f32 %v1141, %v1220
    %1222 = vmatprep.mubr.bf16.mxu0 %v703
    %1223 = vmatmul.mubr.bf16.gmra.mrb[0].mxu0 %v702
    %v1224 = vpop.f32.mrb[0].mxu0
    %v1225 = vadd.f32 %v1145, %v1224
    %v1226 = vpop.f32.mrb[0].mxu0
    %v1227 = vadd.f32 %v1147, %v1226
    %v1228 = vpop.f32.mrb[0].mxu0
    %v1229 = vadd.f32 %v1149, %v1228
    %v1230 = vpop.f32.mrb[0].mxu0
    %v1231 = vadd.f32 %v1151, %v1230
    %1232 = vmatprep.mubr.bf16.mxu0 %v707
    %1233 = vmatmul.mubr.bf16.gmra.mrb[0].mxu0 %v706
    %v1234 = vpop.f32.mrb[0].mxu0
    %v1235 = vadd.f32 %v1155, %v1234
    %v1236 = vpop.f32.mrb[0].mxu0
    %v1237 = vadd.f32 %v1157, %v1236
    %v1238 = vpop.f32.mrb[0].mxu0
    %v1239 = vadd.f32 %v1159, %v1238
    %v1240 = vpop.f32.mrb[0].mxu0
    %v1241 = vadd.f32 %v1161, %v1240
    %1242 = vmatprep.mubr.bf16.mxu0 %v711
    %1243 = vmatmul.mubr.bf16.gmra.mrb[0].mxu0 %v710
    %v1244 = vpop.f32.mrb[0].mxu0
    %v1245 = vadd.f32 %v1165, %v1244
    %v1246 = vpop.f32.mrb[0].mxu0
    %v1247 = vadd.f32 %v1167, %v1246
    %v1248 = vpop.f32.mrb[0].mxu0
    %v1249 = vadd.f32 %v1169, %v1248
    %v1250 = vpop.f32.mrb[0].mxu0
    %v1251 = vadd.f32 %v1171, %v1250
    %1252 = vmatprep.mubr.bf16.mxu0 %v715
    %1253 = vmatmul.mubr.bf16.gmra.mrb[0].mxu0 %v714
    %v1254 = vpop.f32.mrb[0].mxu0
    %v1255 = vpop.f32.mrb[0].mxu0
    %v1256 = vadd.f32 %v1176, %v1255
    %v1257 = vpop.f32.mrb[0].mxu0
    %v1258 = vpop.f32.mrb[0].mxu0
    %1259 = vdwg.mxu0
    %vm1269 = vcmask 1046528
    %v1270 = vrot.slane %v1217, 1
    %v1271 = vrot.slane %v1221, 1
    %v1272 = vsel %vm1269, %v1270, %v1271
    %v1273 = vrot.slane %v1227, 1
    %v1274 = vsel %vm1269, %v1271, %v1273
    %v1275 = vrot.slane %v1231, 1
    %v1276 = vsel %vm1269, %v1273, %v1275
    %v1277 = vrot.slane %v1237, 1
    %v1278 = vsel %vm1269, %v1275, %v1277
    %v1279 = vrot.slane %v1241, 1
    %v1280 = vsel %vm1269, %v1277, %v1279
    %v1281 = vrot.slane %v1247, 1
    %v1282 = vsel %vm1269, %v1279, %v1281
    %v1283 = vrot.slane %v1251, 1
    %v1284 = vsel %vm1269, %v1281, %v1283
    %v1285 = vrot.slane %v1256, 1
    %v1286 = vsel %vm1269, %v1283, %v1285
    %v1295 = vadd.f32 %v1215, %v1272
    %v1296 = vadd.f32 %v1219, %v1274
    %v1297 = vadd.f32 %v1225, %v1276
    %v1298 = vadd.f32 %v1229, %v1278
    %v1299 = vadd.f32 %v1235, %v1280
    %v1300 = vadd.f32 %v1239, %v1282
    %v1301 = vadd.f32 %v1245, %v1284
    %v1302 = vadd.f32 %v1249, %v1286
    %v1303 = vld [vmem:[%s4] sm:$0x1]
    %v1305 = vlaneseq
    %v1306 = vshrl.u32 %v1305, 7
    %v1307 = vsub.s32 0, %v1306
    %v1308 = vrot.slane %v1303, %v1307
    %v1310 = vadd.f32 %v1295, %v1308
    %v1311 = vadd.f32 %v1296, %v1308
    %v1312 = vadd.f32 %v1297, %v1308
    %v1313 = vadd.f32 %v1298, %v1308
    %v1314 = vadd.f32 %v1299, %v1308
    %v1315 = vadd.f32 %v1300, %v1308
    %v1316 = vadd.f32 %v1301, %v1308
    %v1317 = vadd.f32 %v1302, %v1308
    %v1318 = vmul.f32 %v1310, %v1310
    %v1319 = vmul.f32 %v1311, %v1311
    %v1320 = vmul.f32 %v1312, %v1312
    %v1321 = vmul.f32 %v1313, %v1313
    %v1322 = vmul.f32 %v1314, %v1314
    %v1323 = vmul.f32 %v1315, %v1315
    %v1324 = vmul.f32 %v1316, %v1316
    %v1325 = vmul.f32 %v1317, %v1317
    %v1326 = vmul.f32 %v1310, %v1318
    %v1327 = vmul.f32 %v1311, %v1319
    %v1328 = vmul.f32 %v1312, %v1320
    %v1329 = vmul.f32 %v1313, %v1321
    %v1330 = vmul.f32 %v1314, %v1322
    %v1331 = vmul.f32 %v1315, %v1323
    %v1332 = vmul.f32 %v1316, %v1324
    %v1333 = vmul.f32 %v1317, %v1325
    %v1334 = vmul.f32 %v1326, 0.044715
    %v1335 = vmul.f32 %v1327, 0.044715
    %v1336 = vmul.f32 %v1328, 0.044715
    %v1337 = vmul.f32 %v1329, 0.044715
    %v1338 = vmul.f32 %v1330, 0.044715
    %v1339 = vmul.f32 %v1331, 0.044715
    %v1340 = vmul.f32 %v1332, 0.044715
    %v1341 = vmul.f32 %v1333, 0.044715
    %v1342 = vadd.f32 %v1310, %v1334
    %v1343 = vadd.f32 %v1311, %v1335
    %v1344 = vadd.f32 %v1312, %v1336
    %v1345 = vadd.f32 %v1313, %v1337
    %v1346 = vadd.f32 %v1314, %v1338
    %v1347 = vadd.f32 %v1315, %v1339
    %v1348 = vadd.f32 %v1316, %v1340
    %v1349 = vadd.f32 %v1317, %v1341
    %v1350 = vmul.f32 %v1342, 0.7978846
    %v1351 = vmul.f32 %v1343, 0.7978846
    %v1352 = vmul.f32 %v1344, 0.7978846
    %v1353 = vmul.f32 %v1345, 0.7978846
    %v1354 = vmul.f32 %v1346, 0.7978846
    %v1355 = vmul.f32 %v1347, 0.7978846
    %v1356 = vmul.f32 %v1348, 0.7978846
    %v1357 = vmul.f32 %v1349, 0.7978846
    %v1358 = vtanh.pop %v1350
    %v1359 = vtanh.pop %v1351
    %v1360 = vtanh.pop %v1352
    %v1361 = vtanh.pop %v1353
    %v1362 = vtanh.pop %v1354
    %v1363 = vtanh.pop %v1355
    %v1364 = vtanh.pop %v1356
    %v1365 = vtanh.pop %v1357
    %v1366 = vadd.f32 %v1358, 1.0
    %v1367 = vadd.f32 %v1359, 1.0
    %v1368 = vadd.f32 %v1360, 1.0
    %v1369 = vadd.f32 %v1361, 1.0
    %v1370 = vadd.f32 %v1362, 1.0
    %v1371 = vadd.f32 %v1363, 1.0
    %v1372 = vadd.f32 %v1364, 1.0
    %v1373 = vadd.f32 %v1365, 1.0
    %v1374 = vmul.f32 %v1366, 0.5
    %v1375 = vmul.f32 %v1367, 0.5
    %v1376 = vmul.f32 %v1368, 0.5
    %v1377 = vmul.f32 %v1369, 0.5
    %v1378 = vmul.f32 %v1370, 0.5
    %v1379 = vmul.f32 %v1371, 0.5
    %v1380 = vmul.f32 %v1372, 0.5
    %v1381 = vmul.f32 %v1373, 0.5
    %v1382 = vmul.f32 %v1310, %v1374
    %v1383 = vmul.f32 %v1311, %v1375
    %v1384 = vmul.f32 %v1312, %v1376
    %v1385 = vmul.f32 %v1313, %v1377
    %v1386 = vmul.f32 %v1314, %v1378
    %v1387 = vmul.f32 %v1315, %v1379
    %v1388 = vmul.f32 %v1316, %v1380
    %v1389 = vmul.f32 %v1317, %v1381
    %1390 = vadd.xlane.f32.xlu0 %v1382
    %v1391 = vpop.xlane.xlu0 %1390
    %1392 = vadd.xlane.f32.xlu0 %v1383
    %v1393 = vpop.xlane.xlu0 %1392
    %1394 = vadd.xlane.f32.xlu0 %v1384
    %v1395 = vpop.xlane.xlu0 %1394
    %1396 = vadd.xlane.f32.xlu0 %v1385
    %v1397 = vpop.xlane.xlu0 %1396
    %1398 = vadd.xlane.f32.xlu0 %v1386
    %v1399 = vpop.xlane.xlu0 %1398
    %1400 = vadd.xlane.f32.xlu0 %v1387
    %v1401 = vpop.xlane.xlu0 %1400
    %1402 = vadd.xlane.f32.xlu0 %v1388
    %v1403 = vpop.xlane.xlu0 %1402
    %1404 = vadd.xlane.f32.xlu0 %v1389
    %v1405 = vpop.xlane.xlu0 %1404
    %v1406 = vrcp.pop 128.0
    %v1407 = vmul.f32 %v1391, %v1406
    %v1408 = vmul.f32 %v1393, %v1406
    %v1409 = vmul.f32 %v1395, %v1406
    %v1410 = vmul.f32 %v1397, %v1406
    %v1411 = vmul.f32 %v1399, %v1406
    %v1412 = vmul.f32 %v1401, %v1406
    %v1413 = vmul.f32 %v1403, %v1406
    %v1414 = vmul.f32 %v1405, %v1406
    %v1415 = vsub.f32 %v1382, %v1407
    %v1416 = vsub.f32 %v1383, %v1408
    %v1417 = vsub.f32 %v1384, %v1409
    %v1418 = vsub.f32 %v1385, %v1410
    %v1419 = vsub.f32 %v1386, %v1411
    %v1420 = vsub.f32 %v1387, %v1412
    %v1421 = vsub.f32 %v1388, %v1413
    %v1422 = vsub.f32 %v1389, %v1414
    %v1423 = vmul.f32 %v1415, %v1415
    %v1424 = vmul.f32 %v1416, %v1416
    %v1425 = vmul.f32 %v1417, %v1417
    %v1426 = vmul.f32 %v1418, %v1418
    %v1427 = vmul.f32 %v1419, %v1419
    %v1428 = vmul.f32 %v1420, %v1420
    %v1429 = vmul.f32 %v1421, %v1421
    %v1430 = vmul.f32 %v1422, %v1422
    %1431 = vadd.xlane.f32.xlu0 %v1423
    %v1432 = vpop.xlane.xlu0 %1431
    %1433 = vadd.xlane.f32.xlu0 %v1424
    %v1434 = vpop.xlane.xlu0 %1433
    %1435 = vadd.xlane.f32.xlu0 %v1425
    %v1436 = vpop.xlane.xlu0 %1435
    %1437 = vadd.xlane.f32.xlu0 %v1426
    %v1438 = vpop.xlane.xlu0 %1437
    %1439 = vadd.xlane.f32.xlu0 %v1427
    %v1440 = vpop.xlane.xlu0 %1439
    %1441 = vadd.xlane.f32.xlu0 %v1428
    %v1442 = vpop.xlane.xlu0 %1441
    %1443 = vadd.xlane.f32.xlu0 %v1429
    %v1444 = vpop.xlane.xlu0 %1443
    %1445 = vadd.xlane.f32.xlu0 %v1430
    %v1446 = vpop.xlane.xlu0 %1445
    %v1447 = vmul.f32 %v1432, %v1406
    %v1448 = vmul.f32 %v1434, %v1406
    %v1449 = vmul.f32 %v1436, %v1406
    %v1450 = vmul.f32 %v1438, %v1406
    %v1451 = vmul.f32 %v1440, %v1406
    %v1452 = vmul.f32 %v1442, %v1406
    %v1453 = vmul.f32 %v1444, %v1406
    %v1454 = vmul.f32 %v1446, %v1406
    %v1455 = vadd.f32 %v1447, 1e-05
    %v1456 = vadd.f32 %v1448, 1e-05
    %v1457 = vadd.f32 %v1449, 1e-05
    %v1458 = vadd.f32 %v1450, 1e-05
    %v1459 = vadd.f32 %v1451, 1e-05
    %v1460 = vadd.f32 %v1452, 1e-05
    %v1461 = vadd.f32 %v1453, 1e-05
    %v1462 = vadd.f32 %v1454, 1e-05
    %v1463 = vrsqrt.pop %v1455
    %v1464 = vrsqrt.pop %v1456
    %v1465 = vrsqrt.pop %v1457
    %v1466 = vrsqrt.pop %v1458
    %v1467 = vrsqrt.pop %v1459
    %v1468 = vrsqrt.pop %v1460
    %v1469 = vrsqrt.pop %v1461
    %v1470 = vrsqrt.pop %v1462
    %v1471 = vmul.f32 %v1415, %v1463
    %v1472 = vmul.f32 %v1416, %v1464
    %v1473 = vmul.f32 %v1417, %v1465
    %v1474 = vmul.f32 %v1418, %v1466
    %v1475 = vmul.f32 %v1419, %v1467
    %v1476 = vmul.f32 %v1420, %v1468
    %v1477 = vmul.f32 %v1421, %v1469
    %v1478 = vmul.f32 %v1422, %v1470
    %v1479 = vld [vmem:[%s5] sm:$0x1]
    %v1481 = vlaneseq
    %v1482 = vshrl.u32 %v1481, 7
    %v1483 = vsub.s32 0, %v1482
    %v1484 = vrot.slane %v1479, %v1483
    %v1486 = vmul.f32 %v1471, %v1484
    %v1487 = vmul.f32 %v1472, %v1484
    %v1488 = vmul.f32 %v1473, %v1484
    %v1489 = vmul.f32 %v1474, %v1484
    %v1490 = vmul.f32 %v1475, %v1484
    %v1491 = vmul.f32 %v1476, %v1484
    %v1492 = vmul.f32 %v1477, %v1484
    %v1493 = vmul.f32 %v1478, %v1484
    %v1494 = vld [vmem:[%s6] sm:$0x1]
    %v1496 = vlaneseq
    %v1497 = vshrl.u32 %v1496, 7
    %v1498 = vsub.s32 0, %v1497
    %v1499 = vrot.slane %v1494, %v1498
    %v1501 = vadd.f32 %v1486, %v1499
    %v1502 = vadd.f32 %v1487, %v1499
    %v1503 = vadd.f32 %v1488, %v1499
    %v1504 = vadd.f32 %v1489, %v1499
    %v1505 = vadd.f32 %v1490, %v1499
    %v1506 = vadd.f32 %v1491, %v1499
    %v1507 = vadd.f32 %v1492, %v1499
    %v1508 = vadd.f32 %v1493, %v1499
    %v1509 = vpack.c.bf16 %v1502, %v1501
    %v1510 = vpack.c.bf16 %v1504, %v1503
    %v1511 = vpack.c.bf16 %v1506, %v1505
    %v1512 = vpack.c.bf16 %v1508, %v1507
    %v1513 = vld [vmem:[#allocation5] sm:$0xf]
    %v1514 = vld [vmem:[#allocation5 + $0x4] sm:$0xf]
    %v1515 = vld [vmem:[#allocation5 + $0x8] sm:$0xf]
    %v1516 = vld [vmem:[#allocation5 + $0xc] sm:$0xf]
    %v1517 = vld [vmem:[#allocation5 + $0x10] sm:$0xf]
    %v1518 = vld [vmem:[#allocation5 + $0x14] sm:$0xf]
    %v1519 = vld [vmem:[#allocation5 + $0x18] sm:$0xf]
    %v1520 = vld [vmem:[#allocation5 + $0x1c] sm:$0xf]
    %v1521 = vld [vmem:[#allocation5 + $0x20] sm:$0xf]
    %v1522 = vld [vmem:[#allocation5 + $0x24] sm:$0xf]
    %v1523 = vld [vmem:[#allocation5 + $0x28] sm:$0xf]
    %v1524 = vld [vmem:[#allocation5 + $0x2c] sm:$0xf]
    %v1525 = vld [vmem:[#allocation5 + $0x30] sm:$0xf]
    %v1526 = vld [vmem:[#allocation5 + $0x34] sm:$0xf]
    %v1527 = vld [vmem:[#allocation5 + $0x38] sm:$0xf]
    %v1528 = vld [vmem:[#allocation5 + $0x3c] sm:$0xf]
    %v1529 = vld [vmem:[%s8] sm:$0x1]
    %v1531 = vlaneseq
    %v1532 = vshrl.u32 %v1531, 7
    %v1533 = vsub.s32 0, %v1532
    %v1534 = vrot.slane %v1529, %v1533
    %v1552 = vunpack.c.l.b16 %v1513
    %v1553 = vunpack.c.l.b16 %v1514
    %v1554 = vunpack.c.l.b16 %v1515
    %v1555 = vunpack.c.l.b16 %v1516
    %v1556 = vunpack.c.l.b16 %v1517
    %v1557 = vunpack.c.l.b16 %v1518
    %v1558 = vunpack.c.l.b16 %v1519
    %v1559 = vunpack.c.l.b16 %v1520
    %v1560 = vunpack.c.l.b16 %v1521
    %v1561 = vunpack.c.l.b16 %v1522
    %v1562 = vunpack.c.l.b16 %v1523
    %v1563 = vunpack.c.l.b16 %v1524
    %v1564 = vunpack.c.l.b16 %v1525
    %v1565 = vunpack.c.l.b16 %v1526
    %v1566 = vunpack.c.l.b16 %v1527
    %v1567 = vunpack.c.l.b16 %v1528
    %v1568 = vpack.c.b16 %v1553, %v1552
    %v1569 = vpack.c.b16 %v1555, %v1554
    %v1570 = vpack.c.b16 %v1557, %v1556
    %v1571 = vpack.c.b16 %v1559, %v1558
    %v1572 = vpack.c.b16 %v1561, %v1560
    %v1573 = vpack.c.b16 %v1563, %v1562
    %v1574 = vpack.c.b16 %v1565, %v1564
    %v1575 = vpack.c.b16 %v1567, %v1566
    %1584 = vmatprep.subr.bf16.mxu0 0
    %1585 = vmatpush1.bf16.msra.mxu0 %v1568
    %1586 = vmatprep.subr.bf16.mxu0 0
    %1587 = vmatpush1.bf16.msra.mxu0 %v1569
    %1588 = vmatprep.subr.bf16.mxu0 0
    %1589 = vmatpush1.bf16.msra.mxu0 %v1570
    %1590 = vmatprep.subr.bf16.mxu0 0
    %1591 = vmatpush1.bf16.msra.mxu0 %v1571
    %1592 = vmatprep.subr.bf16.mxu0 0
    %1593 = vmatpush1.bf16.msra.mxu0 %v1572
    %1594 = vmatprep.subr.bf16.mxu0 0
    %1595 = vmatpush1.bf16.msra.mxu0 %v1573
    %1596 = vmatprep.subr.bf16.mxu0 0
    %1597 = vmatpush1.bf16.msra.mxu0 %v1574
    %1598 = vmatprep.subr.bf16.mxu0 0
    %1599 = vmatpush1.bf16.msra.mxu0 %v1575
    %1600 = vmatprep.subr.bf16.mxu0 0
    %1601 = vmatpush1.bf16.msra.mxu0 0
    %1602 = vmatprep.subr.bf16.mxu0 0
    %1603 = vmatpush1.bf16.msra.mxu0 0
    %1604 = vmatprep.subr.bf16.mxu0 0
    %1605 = vmatpush1.bf16.msra.mxu0 0
    %1606 = vmatprep.subr.bf16.mxu0 0
    %1607 = vmatpush1.bf16.msra.mxu0 0
    %1608 = vmatprep.subr.bf16.mxu0 0
    %1609 = vmatpush1.bf16.msra.mxu0 0
    %1610 = vmatprep.subr.bf16.mxu0 0
    %1611 = vmatpush1.bf16.msra.mxu0 0
    %1612 = vmatprep.subr.bf16.mxu0 0
    %1613 = vmatpush1.bf16.msra.mxu0 0
    %1614 = vmatprep.subr.bf16.mxu0 0
    %1615 = vmatpush1.bf16.msra.mxu0 0
    %1616 = vmatprep.mubr.bf16.mxu0 0
    %1617 = vmatmul.mubr.bf16.gmra.mrb[0].mxu0 %v1509
    %v1618 = vpop.f32.mrb[0].mxu0
    %v1619 = vadd.f32 %v1534, %v1618
    %v1620 = vpop.f32.mrb[0].mxu0
    %v1621 = vpop.f32.mrb[0].mxu0
    %v1622 = vadd.f32 %v1534, %v1621
    %v1623 = vpop.f32.mrb[0].mxu0
    %1624 = vmatprep.mubr.bf16.mxu0 0
    %1625 = vmatmul.mubr.bf16.gmra.mrb[0].mxu0 %v1510
    %v1626 = vpop.f32.mrb[0].mxu0
    %v1627 = vadd.f32 %v1534, %v1626
    %v1628 = vpop.f32.mrb[0].mxu0
    %v1629 = vpop.f32.mrb[0].mxu0
    %v1630 = vadd.f32 %v1534, %v1629
    %v1631 = vpop.f32.mrb[0].mxu0
    %1632 = vmatprep.mubr.bf16.mxu0 0
    %1633 = vmatmul.mubr.bf16.gmra.mrb[0].mxu0 %v1511
    %v1634 = vpop.f32.mrb[0].mxu0
    %v1635 = vadd.f32 %v1534, %v1634
    %v1636 = vpop.f32.mrb[0].mxu0
    %v1637 = vpop.f32.mrb[0].mxu0
    %v1638 = vadd.f32 %v1534, %v1637
    %v1639 = vpop.f32.mrb[0].mxu0
    %1640 = vmatprep.mubr.bf16.mxu0 0
    %1641 = vmatmul.mubr.bf16.gmra.mrb[0].mxu0 %v1512
    %v1642 = vpop.f32.mrb[0].mxu0
    %v1643 = vadd.f32 %v1534, %v1642
    %v1644 = vpop.f32.mrb[0].mxu0
    %v1645 = vpop.f32.mrb[0].mxu0
    %v1646 = vadd.f32 %v1534, %v1645
    %v1647 = vpop.f32.mrb[0].mxu0
    %1648 = vdwg.mxu0
    %1649 = vst [vmem:[#allocation7] sm:$0xff] %v1619
    %1650 = vst [vmem:[#allocation7 + $0x8] sm:$0xff] %v1622
    %1651 = vst [vmem:[#allocation7 + $0x10] sm:$0xff] %v1627
    %1652 = vst [vmem:[#allocation7 + $0x18] sm:$0xff] %v1630
    %1653 = vst [vmem:[#allocation7 + $0x20] sm:$0xff] %v1635
    %1654 = vst [vmem:[#allocation7 + $0x28] sm:$0xff] %v1638
    %1655 = vst [vmem:[#allocation7 + $0x30] sm:$0xff] %v1643
    %1656 = vst [vmem:[#allocation7 + $0x38] sm:$0xff] %v1646
    // Predicated region
    $region46: #{tpu_custom_call.1} parent=1 // pred_check
      _
    $region47: #{tpu_custom_call.1} parent=1 // pred_check_branch
      %1658 = sbr.rel (0) target = $region49
    $region48: #{tpu_custom_call.1} parent=1 // pred_region
      %s1660 = ssub.s32 1024, 1024
      %1661 = vsyncadd [#allocation4], %s1660
      %s1662 = sshll.u32 [#allocation7], 4
      %s1663 = int_to_ptr.vmem [resolvable:$true] %s1662
      %1668 = dma.vmem_to_hbm [thread:$0]  %s1663, 1024, %s9, [#allocation4], 128, 128, 8
    $region49: #{tpu_custom_call.1} parent=1 // pred_fallthru
      _
    // Predicated region
    $region50: #{tpu_custom_call.1} parent=1 // pred_check
      _
    $region51: #{tpu_custom_call.1} parent=1 // pred_check_branch
      %1670 = sbr.rel (0) target = $region53
    $region52: #{tpu_custom_call.1} parent=1 // pred_region
      %1671 = dma.done [#allocation4], 1024
    $region53: #{tpu_custom_call.1} parent=1 // pred_fallthru
      _
    %1672 = vsyncpa [#allocation3], 1
    %1673 = vsyncpa [#allocation6], 1
    %1674 = vsyncpa [#allocation4], 1

</llo_original>
